<compile_context>
chip_gen: v6e
topology: v6e:2x2x1
jax: 0.10.0
libtpu: 0.0.40
codegen_flags: <defaults>
</compile_context>

<pallas_src>
import functools

import jax
import jax.numpy as jnp
import numpy as np
from jax import lax
from jax.experimental import pallas as pl
from jax.experimental.pallas import tpu as pltpu


def _lstm_recurrence_kernel(gx_ref, whh_ref, out_ref, h_sc, c_sc, *, hidden, t_blk):
    """Recurrent part of one LSTM layer (input projection already hoisted).

    Grid axis 0 = block of T_BLK time steps (sequential).

    gx_ref:  (T_BLK, B, 4H) f32   precomputed x_t @ W_ih^T + (b_ih + b_hh)
    whh_ref: (H, 4H)        bf16  W_hh^T, constant block index -> stays resident
    out_ref: (T_BLK, B, H)  f32   hidden state for every step of this block
    h_sc, c_sc: (B, H) f32        carried recurrent state
    """
    @pl.when(pl.program_id(0) == 0)
    def _():
        h_sc[...] = jnp.zeros_like(h_sc)
        c_sc[...] = jnp.zeros_like(c_sc)

    H = hidden
    whh = whh_ref[...]                       # (H, 4H) bf16, load once per grid step

    def step(i, carry):
        h_prev = h_sc[...]                   # (B, H) f32
        c_prev = c_sc[...]                   # (B, H) f32

        # single recurrent MXU dot per step: bf16 operands, f32 accumulation
        gates = gx_ref[i] + jnp.dot(h_prev.astype(jnp.bfloat16), whh,
                                    preferred_element_type=jnp.float32)   # (B, 4H) f32

        # H is a multiple of 128 -> gate slices are lane-aligned (no relayout).
        i_g = jax.nn.sigmoid(gates[:, 0 * H:1 * H])
        f_g = jax.nn.sigmoid(gates[:, 1 * H:2 * H])
        g_g = jnp.tanh(gates[:, 2 * H:3 * H])
        o_g = jax.nn.sigmoid(gates[:, 3 * H:4 * H])

        c_new = f_g * c_prev + i_g * g_g
        h_new = o_g * jnp.tanh(c_new)

        c_sc[...] = c_new
        h_sc[...] = h_new
        out_ref[i] = h_new                   # accumulated into the (T_BLK,B,H) slab
        return carry

    lax.fori_loop(0, t_blk, step, 0, unroll=True)


def _largest_divisor_leq(n, cap):
    for d in range(min(n, cap), 0, -1):
        if n % d == 0:
            return d
    return 1


def lstm_layer_pallas(x_tbd, w_ih, w_hh, b_ih, b_hh, *, t_blk_cap=16):
    """One LSTM layer over the whole sequence.

    x_tbd: (T, B, D_in) f32
    w_ih: (4H, D_in), w_hh: (4H, H), b_ih/b_hh: (4H,)   (PyTorch layout, gate order i,f,g,o)
    returns (T, B, H) f32  -- hidden states at every time step.
    """
    T, B, D = x_tbd.shape
    H = w_hh.shape[1]

    # ---- hoisted input projection: one big (T*B, D) x (D, 4H) MXU matmul in XLA ----
    wih_t = jnp.transpose(w_ih).astype(jnp.bfloat16)           # (D, 4H)
    bias = (b_ih + b_hh).astype(jnp.float32)                   # (4H,)
    gx = jnp.dot(x_tbd.reshape(T * B, D).astype(jnp.bfloat16), wih_t,
                 preferred_element_type=jnp.float32)
    gx = (gx + bias[None, :]).reshape(T, B, 4 * H)             # (T, B, 4H) f32

    whh_t = jnp.transpose(w_hh).astype(jnp.bfloat16)           # (H, 4H)

    t_blk = _largest_divisor_leq(T, t_blk_cap)
    kernel = functools.partial(_lstm_recurrence_kernel, hidden=H, t_blk=t_blk)

    out = pl.pallas_call(
        kernel,
        out_shape=jax.ShapeDtypeStruct((T, B, H), jnp.float32),
        grid_spec=pltpu.PrefetchScalarGridSpec(
            num_scalar_prefetch=0,
            grid=(T // t_blk,),
            in_specs=[
                pl.BlockSpec((t_blk, B, 4 * H), lambda t: (t, 0, 0)),   # hoisted gates
                pl.BlockSpec((H, 4 * H), lambda t: (0, 0)),             # resident W_hh^T
            ],
            out_specs=pl.BlockSpec((t_blk, B, H), lambda t: (t, 0, 0)),
            scratch_shapes=[
                pltpu.VMEM((B, H), jnp.float32),   # h
                pltpu.VMEM((B, H), jnp.float32),   # c
            ],
        ),
        compiler_params=pltpu.CompilerParams(
            dimension_semantics=("arbitrary",)),   # time recurrence is sequential
    )(gx, whh_t)
    return out


class LSTMBlockPallas:
    """JAX/Pallas equivalent of lstm_block (nn.LSTM, batch_first, zero init state)."""

    def __init__(self, input_size, time_step, hidden_size=128, num_layers=2, key=None):
        self.input_size = input_size
        self.time_step = time_step
        self.hidden_size = hidden_size
        self.num_layers = num_layers
        if key is None:
            key = jax.random.PRNGKey(0)
        k = 1.0 / np.sqrt(hidden_size)
        self.params = []
        for layer in range(num_layers):
            d_in = input_size if layer == 0 else hidden_size
            key, k1, k2, k3, k4 = jax.random.split(key, 5)
            w_ih = jax.random.uniform(k1, (4 * hidden_size, d_in), jnp.float32, -k, k)
            w_hh = jax.random.uniform(k2, (4 * hidden_size, hidden_size), jnp.float32, -k, k)
            b_ih = jax.random.uniform(k3, (4 * hidden_size,), jnp.float32, -k, k)
            b_hh = jax.random.uniform(k4, (4 * hidden_size,), jnp.float32, -k, k)
            self.params.append((w_ih, w_hh, b_ih, b_hh))

    def __call__(self, x):
        # x.view(-1, time_step, input_size)
        x = x.reshape(-1, self.time_step, self.input_size)
        # time-major so the sequential kernel grid walks over time
        seq = jnp.transpose(x, (1, 0, 2)).astype(jnp.float32)          # (T, B, D)
        for (w_ih, w_hh, b_ih, b_hh) in self.params:
            # every layer's input projection (including layers > 0) is a full-height
            # (T*B, K) matmul done in XLA; only the recurrence runs in the kernel.
            seq = lstm_layer_pallas(seq, w_ih, w_hh, b_ih, b_hh)       # (T, B, H)
        # r_out[:, -1, :]  (batch_first) == last time step of last layer
        return seq[-1]                                                  # (B, H)


def _lstm_layer_ref(x_tbd, w_ih, w_hh, b_ih, b_hh):
    """Pure-JAX reference (lax.scan) mirroring the kernel's bf16-operand math."""
    T, B, D = x_tbd.shape
    H = w_hh.shape[1]
    wih_t = jnp.transpose(w_ih).astype(jnp.bfloat16)
    whh_t = jnp.transpose(w_hh).astype(jnp.bfloat16)
    bias = (b_ih + b_hh).astype(jnp.float32)

    def step(carry, x_t):
        h, c = carry
        gates = (jnp.dot(x_t.astype(jnp.bfloat16), wih_t, preferred_element_type=jnp.float32)
                 + jnp.dot(h.astype(jnp.bfloat16), whh_t, preferred_element_type=jnp.float32)
                 + bias)
        i, f, g, o = jnp.split(gates, 4, axis=-1)
        i, f, o = jax.nn.sigmoid(i), jax.nn.sigmoid(f), jax.nn.sigmoid(o)
        g = jnp.tanh(g)
        c = f * c + i * g
        h = o * jnp.tanh(c)
        return (h, c), h

    init = (jnp.zeros((B, H), jnp.float32), jnp.zeros((B, H), jnp.float32))
    _, hs = jax.lax.scan(step, init, x_tbd)
    return hs


if __name__ == "__main__":
    # small shapes consistent with the module (nn.LSTM defaults: hidden=128, 2 layers)
    batch, time_step, input_size = 2, 8, 16
    hidden, num_layers = 128, 2

    model = LSTMBlockPallas(input_size, time_step, hidden_size=hidden,
                            num_layers=num_layers, key=jax.random.PRNGKey(42))

    x = jax.random.normal(jax.random.PRNGKey(0), (batch, time_step, input_size),
                          dtype=jnp.float32)

    out = jax.block_until_ready(jax.jit(model.__call__)(x))
    assert out.shape == (batch, hidden)

    # Cross-check against the pure-JAX reference (same mixed precision).
    seq = jnp.transpose(x.reshape(-1, time_step, input_size), (1, 0, 2)).astype(jnp.float32)
    for (w_ih, w_hh, b_ih, b_hh) in model.params:
        seq = _lstm_layer_ref(seq, w_ih, w_hh, b_ih, b_hh)
    ref = seq[-1]
    np.testing.assert_allclose(np.asarray(out), np.asarray(ref), rtol=2e-3, atol=2e-3)

    print("KERNEL_OK")
</pallas_src>

<mosaic_0001>
module attributes {stable_mosaic.version = 11 : i64} {
  func.func @_lstm_recurrence_kernel(%arg0: i32, %arg1: memref<8x2x512xf32, #tpu.memory_space<vmem>>, %arg2: memref<128x512xbf16, #tpu.memory_space<vmem>>, %arg3: memref<8x2x128xf32, #tpu.memory_space<vmem>>, %arg4: memref<2x128xf32, #tpu.memory_space<vmem>>, %arg5: memref<2x128xf32, #tpu.memory_space<vmem>>) attributes {dimension_semantics = [#tpu.dimension_semantics<arbitrary>], iteration_bounds = array<i64: 1>, scalar_prefetch = 0 : i64, scratch_operands = 2 : i64, tpu.core_type = #tpu.core_type<tc>, window_params = [{transform_indices = @transform_0, window_bounds = array<i64: 8, 2, 512>}, {pipeline_mode = #tpu.pipeline_mode<synchronous>, transform_indices = @transform_1, window_bounds = array<i64: 128, 512>}, {transform_indices = @transform_2, window_bounds = array<i64: 8, 2, 128>}]} {
    %c0_i32 = arith.constant 0 : i32
    %0 = arith.cmpi eq, %arg0, %c0_i32 : i32
    %1 = arith.extui %0 : i1 to i32
    %c0_i32_0 = arith.constant 0 : i32
    %2 = arith.cmpi ne, %1, %c0_i32_0 : i32
    scf.if %2 {
      %cst_130 = arith.constant 0.000000e+00 : f32
      %316 = vector.broadcast %cst_130 : f32 to vector<2x128xf32>
      %c0_131 = arith.constant 0 : index
      %c0_132 = arith.constant 0 : index
      %317 = vector.load %arg4[%c0_131, %c0_132] : memref<2x128xf32, #tpu.memory_space<vmem>>, vector<2x128xf32>
      tpu.vector_store %arg4[%c0_131, %c0_132], %316 {strides = array<i32>} : memref<2x128xf32, #tpu.memory_space<vmem>>, vector<2x128xf32>,
      %cst_133 = arith.constant 0.000000e+00 : f32
      %318 = vector.broadcast %cst_133 : f32 to vector<2x128xf32>
      %c0_134 = arith.constant 0 : index
      %c0_135 = arith.constant 0 : index
      %319 = vector.load %arg5[%c0_134, %c0_135] : memref<2x128xf32, #tpu.memory_space<vmem>>, vector<2x128xf32>
      tpu.vector_store %arg5[%c0_134, %c0_135], %318 {strides = array<i32>} : memref<2x128xf32, #tpu.memory_space<vmem>>, vector<2x128xf32>,
    } else {
    }
    %c0 = arith.constant 0 : index
    %c0_1 = arith.constant 0 : index
    %3 = vector.load %arg2[%c0, %c0_1] : memref<128x512xbf16, #tpu.memory_space<vmem>>, vector<128x512xbf16>
    %c0_i32_2 = arith.constant 0 : i32
    %c0_3 = arith.constant 0 : index
    %c0_4 = arith.constant 0 : index
    %4 = vector.load %arg4[%c0_3, %c0_4] : memref<2x128xf32, #tpu.memory_space<vmem>>, vector<2x128xf32>
    %c0_5 = arith.constant 0 : index
    %c0_6 = arith.constant 0 : index
    %5 = vector.load %arg5[%c0_5, %c0_6] : memref<2x128xf32, #tpu.memory_space<vmem>>, vector<2x128xf32>
    %6 = arith.index_cast %c0_i32_2 : i32 to index
    %c0_7 = arith.constant 0 : index
    %c0_8 = arith.constant 0 : index
    %7 = vector.load %arg1[%6, %c0_7, %c0_8] : memref<8x2x512xf32, #tpu.memory_space<vmem>>, vector<1x2x512xf32>
    %8 = vector.shape_cast %7 : vector<1x2x512xf32> to vector<2x512xf32>
    %9 = arith.truncf %4 : vector<2x128xf32> to vector<2x128xbf16>
    %cst = arith.constant dense<0.000000e+00> : vector<2x512xf32>
    %10 = tpu.matmul %9, %3, %cst {dimension_numbers = #tpu.dot_dimension_numbers<[1], [0], [0], [1], [0, 0, 1, 1], [], []>} : vector<2x128xbf16>, vector<128x512xbf16>, vector<2x512xf32> -> vector<2x512xf32>
    %11 = arith.addf %8, %10 : vector<2x512xf32>
    %12 = vector.extract_strided_slice %11 {offsets = [0, 0], sizes = [2, 128], strides = [1, 1]} : vector<2x512xf32> to vector<2x128xf32>
    %13 = arith.negf %12 : vector<2x128xf32>
    %14 = math.exp %13 : vector<2x128xf32>
    %cst_9 = arith.constant 1.000000e+00 : f32
    %15 = vector.broadcast %cst_9 : f32 to vector<2x128xf32>
    %16 = arith.addf %15, %14 : vector<2x128xf32>
    %17 = arith.divf %15, %16 : vector<2x128xf32>
    %18 = vector.extract_strided_slice %11 {offsets = [0, 128], sizes = [2, 128], strides = [1, 1]} : vector<2x512xf32> to vector<2x128xf32>
    %19 = arith.negf %18 : vector<2x128xf32>
    %20 = math.exp %19 : vector<2x128xf32>
    %cst_10 = arith.constant 1.000000e+00 : f32
    %21 = vector.broadcast %cst_10 : f32 to vector<2x128xf32>
    %22 = arith.addf %21, %20 : vector<2x128xf32>
    %23 = arith.divf %21, %22 : vector<2x128xf32>
    %24 = vector.extract_strided_slice %11 {offsets = [0, 256], sizes = [2, 128], strides = [1, 1]} : vector<2x512xf32> to vector<2x128xf32>
    %25 = math.tanh %24 : vector<2x128xf32>
    %26 = vector.extract_strided_slice %11 {offsets = [0, 384], sizes = [2, 128], strides = [1, 1]} : vector<2x512xf32> to vector<2x128xf32>
    %27 = arith.negf %26 : vector<2x128xf32>
    %28 = math.exp %27 : vector<2x128xf32>
    %cst_11 = arith.constant 1.000000e+00 : f32
    %29 = vector.broadcast %cst_11 : f32 to vector<2x128xf32>
    %30 = arith.addf %29, %28 : vector<2x128xf32>
    %31 = arith.divf %29, %30 : vector<2x128xf32>
    %32 = arith.mulf %23, %5 : vector<2x128xf32>
    %33 = arith.mulf %17, %25 : vector<2x128xf32>
    %34 = arith.addf %32, %33 : vector<2x128xf32>
    %35 = math.tanh %34 : vector<2x128xf32>
    %36 = arith.mulf %31, %35 : vector<2x128xf32>
    %c0_12 = arith.constant 0 : index
    %c0_13 = arith.constant 0 : index
    %37 = vector.load %arg5[%c0_12, %c0_13] : memref<2x128xf32, #tpu.memory_space<vmem>>, vector<2x128xf32>
    tpu.vector_store %arg5[%c0_12, %c0_13], %34 {strides = array<i32>} : memref<2x128xf32, #tpu.memory_space<vmem>>, vector<2x128xf32>,
    %c0_14 = arith.constant 0 : index
    %c0_15 = arith.constant 0 : index
    %38 = vector.load %arg4[%c0_14, %c0_15] : memref<2x128xf32, #tpu.memory_space<vmem>>, vector<2x128xf32>
    tpu.vector_store %arg4[%c0_14, %c0_15], %36 {strides = array<i32>} : memref<2x128xf32, #tpu.memory_space<vmem>>, vector<2x128xf32>,
    %39 = arith.index_cast %c0_i32_2 : i32 to index
    %c0_16 = arith.constant 0 : index
    %c0_17 = arith.constant 0 : index
    %40 = vector.load %arg3[%39, %c0_16, %c0_17] : memref<8x2x128xf32, #tpu.memory_space<vmem>>, vector<1x2x128xf32>
    %41 = vector.shape_cast %40 : vector<1x2x128xf32> to vector<2x128xf32>
    %42 = vector.shape_cast %36 : vector<2x128xf32> to vector<1x2x128xf32>
    tpu.vector_store %arg3[%39, %c0_16, %c0_17], %42 {strides = array<i32>} : memref<8x2x128xf32, #tpu.memory_space<vmem>>, vector<1x2x128xf32>,
    %c1_i32 = arith.constant 1 : i32
    %c0_18 = arith.constant 0 : index
    %c0_19 = arith.constant 0 : index
    %43 = vector.load %arg4[%c0_18, %c0_19] : memref<2x128xf32, #tpu.memory_space<vmem>>, vector<2x128xf32>
    %c0_20 = arith.constant 0 : index
    %c0_21 = arith.constant 0 : index
    %44 = vector.load %arg5[%c0_20, %c0_21] : memref<2x128xf32, #tpu.memory_space<vmem>>, vector<2x128xf32>
    %45 = arith.index_cast %c1_i32 : i32 to index
    %c0_22 = arith.constant 0 : index
    %c0_23 = arith.constant 0 : index
    %46 = vector.load %arg1[%45, %c0_22, %c0_23] : memref<8x2x512xf32, #tpu.memory_space<vmem>>, vector<1x2x512xf32>
    %47 = vector.shape_cast %46 : vector<1x2x512xf32> to vector<2x512xf32>
    %48 = arith.truncf %43 : vector<2x128xf32> to vector<2x128xbf16>
    %cst_24 = arith.constant dense<0.000000e+00> : vector<2x512xf32>
    %49 = tpu.matmul %48, %3, %cst_24 {dimension_numbers = #tpu.dot_dimension_numbers<[1], [0], [0], [1], [0, 0, 1, 1], [], []>} : vector<2x128xbf16>, vector<128x512xbf16>, vector<2x512xf32> -> vector<2x512xf32>
    %50 = arith.addf %47, %49 : vector<2x512xf32>
    %51 = vector.extract_strided_slice %50 {offsets = [0, 0], sizes = [2, 128], strides = [1, 1]} : vector<2x512xf32> to vector<2x128xf32>
    %52 = arith.negf %51 : vector<2x128xf32>
    %53 = math.exp %52 : vector<2x128xf32>
    %cst_25 = arith.constant 1.000000e+00 : f32
    %54 = vector.broadcast %cst_25 : f32 to vector<2x128xf32>
    %55 = arith.addf %54, %53 : vector<2x128xf32>
    %56 = arith.divf %54, %55 : vector<2x128xf32>
    %57 = vector.extract_strided_slice %50 {offsets = [0, 128], sizes = [2, 128], strides = [1, 1]} : vector<2x512xf32> to vector<2x128xf32>
    %58 = arith.negf %57 : vector<2x128xf32>
    %59 = math.exp %58 : vector<2x128xf32>
    %cst_26 = arith.constant 1.000000e+00 : f32
    %60 = vector.broadcast %cst_26 : f32 to vector<2x128xf32>
    %61 = arith.addf %60, %59 : vector<2x128xf32>
    %62 = arith.divf %60, %61 : vector<2x128xf32>
    %63 = vector.extract_strided_slice %50 {offsets = [0, 256], sizes = [2, 128], strides = [1, 1]} : vector<2x512xf32> to vector<2x128xf32>
    %64 = math.tanh %63 : vector<2x128xf32>
    %65 = vector.extract_strided_slice %50 {offsets = [0, 384], sizes = [2, 128], strides = [1, 1]} : vector<2x512xf32> to vector<2x128xf32>
    %66 = arith.negf %65 : vector<2x128xf32>
    %67 = math.exp %66 : vector<2x128xf32>
    %cst_27 = arith.constant 1.000000e+00 : f32
    %68 = vector.broadcast %cst_27 : f32 to vector<2x128xf32>
    %69 = arith.addf %68, %67 : vector<2x128xf32>
    %70 = arith.divf %68, %69 : vector<2x128xf32>
    %71 = arith.mulf %62, %44 : vector<2x128xf32>
    %72 = arith.mulf %56, %64 : vector<2x128xf32>
    %73 = arith.addf %71, %72 : vector<2x128xf32>
    %74 = math.tanh %73 : vector<2x128xf32>
    %75 = arith.mulf %70, %74 : vector<2x128xf32>
    %c0_28 = arith.constant 0 : index
    %c0_29 = arith.constant 0 : index
    %76 = vector.load %arg5[%c0_28, %c0_29] : memref<2x128xf32, #tpu.memory_space<vmem>>, vector<2x128xf32>
    tpu.vector_store %arg5[%c0_28, %c0_29], %73 {strides = array<i32>} : memref<2x128xf32, #tpu.memory_space<vmem>>, vector<2x128xf32>,
    %c0_30 = arith.constant 0 : index
    %c0_31 = arith.constant 0 : index
    %77 = vector.load %arg4[%c0_30, %c0_31] : memref<2x128xf32, #tpu.memory_space<vmem>>, vector<2x128xf32>
    tpu.vector_store %arg4[%c0_30, %c0_31], %75 {strides = array<i32>} : memref<2x128xf32, #tpu.memory_space<vmem>>, vector<2x128xf32>,
    %78 = arith.index_cast %c1_i32 : i32 to index
    %c0_32 = arith.constant 0 : index
    %c0_33 = arith.constant 0 : index
    %79 = vector.load %arg3[%78, %c0_32, %c0_33] : memref<8x2x128xf32, #tpu.memory_space<vmem>>, vector<1x2x128xf32>
    %80 = vector.shape_cast %79 : vector<1x2x128xf32> to vector<2x128xf32>
    %81 = vector.shape_cast %75 : vector<2x128xf32> to vector<1x2x128xf32>
    tpu.vector_store %arg3[%78, %c0_32, %c0_33], %81 {strides = array<i32>} : memref<8x2x128xf32, #tpu.memory_space<vmem>>, vector<1x2x128xf32>,
    %c2_i32 = arith.constant 2 : i32
    %c0_34 = arith.constant 0 : index
    %c0_35 = arith.constant 0 : index
    %82 = vector.load %arg4[%c0_34, %c0_35] : memref<2x128xf32, #tpu.memory_space<vmem>>, vector<2x128xf32>
    %c0_36 = arith.constant 0 : index
    %c0_37 = arith.constant 0 : index
    %83 = vector.load %arg5[%c0_36, %c0_37] : memref<2x128xf32, #tpu.memory_space<vmem>>, vector<2x128xf32>
    %84 = arith.index_cast %c2_i32 : i32 to index
    %c0_38 = arith.constant 0 : index
    %c0_39 = arith.constant 0 : index
    %85 = vector.load %arg1[%84, %c0_38, %c0_39] : memref<8x2x512xf32, #tpu.memory_space<vmem>>, vector<1x2x512xf32>
    %86 = vector.shape_cast %85 : vector<1x2x512xf32> to vector<2x512xf32>
    %87 = arith.truncf %82 : vector<2x128xf32> to vector<2x128xbf16>
    %cst_40 = arith.constant dense<0.000000e+00> : vector<2x512xf32>
    %88 = tpu.matmul %87, %3, %cst_40 {dimension_numbers = #tpu.dot_dimension_numbers<[1], [0], [0], [1], [0, 0, 1, 1], [], []>} : vector<2x128xbf16>, vector<128x512xbf16>, vector<2x512xf32> -> vector<2x512xf32>
    %89 = arith.addf %86, %88 : vector<2x512xf32>
    %90 = vector.extract_strided_slice %89 {offsets = [0, 0], sizes = [2, 128], strides = [1, 1]} : vector<2x512xf32> to vector<2x128xf32>
    %91 = arith.negf %90 : vector<2x128xf32>
    %92 = math.exp %91 : vector<2x128xf32>
    %cst_41 = arith.constant 1.000000e+00 : f32
    %93 = vector.broadcast %cst_41 : f32 to vector<2x128xf32>
    %94 = arith.addf %93, %92 : vector<2x128xf32>
    %95 = arith.divf %93, %94 : vector<2x128xf32>
    %96 = vector.extract_strided_slice %89 {offsets = [0, 128], sizes = [2, 128], strides = [1, 1]} : vector<2x512xf32> to vector<2x128xf32>
    %97 = arith.negf %96 : vector<2x128xf32>
    %98 = math.exp %97 : vector<2x128xf32>
    %cst_42 = arith.constant 1.000000e+00 : f32
    %99 = vector.broadcast %cst_42 : f32 to vector<2x128xf32>
    %100 = arith.addf %99, %98 : vector<2x128xf32>
    %101 = arith.divf %99, %100 : vector<2x128xf32>
    %102 = vector.extract_strided_slice %89 {offsets = [0, 256], sizes = [2, 128], strides = [1, 1]} : vector<2x512xf32> to vector<2x128xf32>
    %103 = math.tanh %102 : vector<2x128xf32>
    %104 = vector.extract_strided_slice %89 {offsets = [0, 384], sizes = [2, 128], strides = [1, 1]} : vector<2x512xf32> to vector<2x128xf32>
    %105 = arith.negf %104 : vector<2x128xf32>
    %106 = math.exp %105 : vector<2x128xf32>
    %cst_43 = arith.constant 1.000000e+00 : f32
    %107 = vector.broadcast %cst_43 : f32 to vector<2x128xf32>
    %108 = arith.addf %107, %106 : vector<2x128xf32>
    %109 = arith.divf %107, %108 : vector<2x128xf32>
    %110 = arith.mulf %101, %83 : vector<2x128xf32>
    %111 = arith.mulf %95, %103 : vector<2x128xf32>
    %112 = arith.addf %110, %111 : vector<2x128xf32>
    %113 = math.tanh %112 : vector<2x128xf32>
    %114 = arith.mulf %109, %113 : vector<2x128xf32>
    %c0_44 = arith.constant 0 : index
    %c0_45 = arith.constant 0 : index
    %115 = vector.load %arg5[%c0_44, %c0_45] : memref<2x128xf32, #tpu.memory_space<vmem>>, vector<2x128xf32>
    tpu.vector_store %arg5[%c0_44, %c0_45], %112 {strides = array<i32>} : memref<2x128xf32, #tpu.memory_space<vmem>>, vector<2x128xf32>,
    %c0_46 = arith.constant 0 : index
    %c0_47 = arith.constant 0 : index
    %116 = vector.load %arg4[%c0_46, %c0_47] : memref<2x128xf32, #tpu.memory_space<vmem>>, vector<2x128xf32>
    tpu.vector_store %arg4[%c0_46, %c0_47], %114 {strides = array<i32>} : memref<2x128xf32, #tpu.memory_space<vmem>>, vector<2x128xf32>,
    %117 = arith.index_cast %c2_i32 : i32 to index
    %c0_48 = arith.constant 0 : index
    %c0_49 = arith.constant 0 : index
    %118 = vector.load %arg3[%117, %c0_48, %c0_49] : memref<8x2x128xf32, #tpu.memory_space<vmem>>, vector<1x2x128xf32>
    %119 = vector.shape_cast %118 : vector<1x2x128xf32> to vector<2x128xf32>
    %120 = vector.shape_cast %114 : vector<2x128xf32> to vector<1x2x128xf32>
    tpu.vector_store %arg3[%117, %c0_48, %c0_49], %120 {strides = array<i32>} : memref<8x2x128xf32, #tpu.memory_space<vmem>>, vector<1x2x128xf32>,
    %c3_i32 = arith.constant 3 : i32
    %c0_50 = arith.constant 0 : index
    %c0_51 = arith.constant 0 : index
    %121 = vector.load %arg4[%c0_50, %c0_51] : memref<2x128xf32, #tpu.memory_space<vmem>>, vector<2x128xf32>
    %c0_52 = arith.constant 0 : index
    %c0_53 = arith.constant 0 : index
    %122 = vector.load %arg5[%c0_52, %c0_53] : memref<2x128xf32, #tpu.memory_space<vmem>>, vector<2x128xf32>
    %123 = arith.index_cast %c3_i32 : i32 to index
    %c0_54 = arith.constant 0 : index
    %c0_55 = arith.constant 0 : index
    %124 = vector.load %arg1[%123, %c0_54, %c0_55] : memref<8x2x512xf32, #tpu.memory_space<vmem>>, vector<1x2x512xf32>
    %125 = vector.shape_cast %124 : vector<1x2x512xf32> to vector<2x512xf32>
    %126 = arith.truncf %121 : vector<2x128xf32> to vector<2x128xbf16>
    %cst_56 = arith.constant dense<0.000000e+00> : vector<2x512xf32>
    %127 = tpu.matmul %126, %3, %cst_56 {dimension_numbers = #tpu.dot_dimension_numbers<[1], [0], [0], [1], [0, 0, 1, 1], [], []>} : vector<2x128xbf16>, vector<128x512xbf16>, vector<2x512xf32> -> vector<2x512xf32>
    %128 = arith.addf %125, %127 : vector<2x512xf32>
    %129 = vector.extract_strided_slice %128 {offsets = [0, 0], sizes = [2, 128], strides = [1, 1]} : vector<2x512xf32> to vector<2x128xf32>
    %130 = arith.negf %129 : vector<2x128xf32>
    %131 = math.exp %130 : vector<2x128xf32>
    %cst_57 = arith.constant 1.000000e+00 : f32
    %132 = vector.broadcast %cst_57 : f32 to vector<2x128xf32>
    %133 = arith.addf %132, %131 : vector<2x128xf32>
    %134 = arith.divf %132, %133 : vector<2x128xf32>
    %135 = vector.extract_strided_slice %128 {offsets = [0, 128], sizes = [2, 128], strides = [1, 1]} : vector<2x512xf32> to vector<2x128xf32>
    %136 = arith.negf %135 : vector<2x128xf32>
    %137 = math.exp %136 : vector<2x128xf32>
    %cst_58 = arith.constant 1.000000e+00 : f32
    %138 = vector.broadcast %cst_58 : f32 to vector<2x128xf32>
    %139 = arith.addf %138, %137 : vector<2x128xf32>
    %140 = arith.divf %138, %139 : vector<2x128xf32>
    %141 = vector.extract_strided_slice %128 {offsets = [0, 256], sizes = [2, 128], strides = [1, 1]} : vector<2x512xf32> to vector<2x128xf32>
    %142 = math.tanh %141 : vector<2x128xf32>
    %143 = vector.extract_strided_slice %128 {offsets = [0, 384], sizes = [2, 128], strides = [1, 1]} : vector<2x512xf32> to vector<2x128xf32>
    %144 = arith.negf %143 : vector<2x128xf32>
    %145 = math.exp %144 : vector<2x128xf32>
    %cst_59 = arith.constant 1.000000e+00 : f32
    %146 = vector.broadcast %cst_59 : f32 to vector<2x128xf32>
    %147 = arith.addf %146, %145 : vector<2x128xf32>
    %148 = arith.divf %146, %147 : vector<2x128xf32>
    %149 = arith.mulf %140, %122 : vector<2x128xf32>
    %150 = arith.mulf %134, %142 : vector<2x128xf32>
    %151 = arith.addf %149, %150 : vector<2x128xf32>
    %152 = math.tanh %151 : vector<2x128xf32>
    %153 = arith.mulf %148, %152 : vector<2x128xf32>
    %c0_60 = arith.constant 0 : index
    %c0_61 = arith.constant 0 : index
    %154 = vector.load %arg5[%c0_60, %c0_61] : memref<2x128xf32, #tpu.memory_space<vmem>>, vector<2x128xf32>
    tpu.vector_store %arg5[%c0_60, %c0_61], %151 {strides = array<i32>} : memref<2x128xf32, #tpu.memory_space<vmem>>, vector<2x128xf32>,
    %c0_62 = arith.constant 0 : index
    %c0_63 = arith.constant 0 : index
    %155 = vector.load %arg4[%c0_62, %c0_63] : memref<2x128xf32, #tpu.memory_space<vmem>>, vector<2x128xf32>
    tpu.vector_store %arg4[%c0_62, %c0_63], %153 {strides = array<i32>} : memref<2x128xf32, #tpu.memory_space<vmem>>, vector<2x128xf32>,
    %156 = arith.index_cast %c3_i32 : i32 to index
    %c0_64 = arith.constant 0 : index
    %c0_65 = arith.constant 0 : index
    %157 = vector.load %arg3[%156, %c0_64, %c0_65] : memref<8x2x128xf32, #tpu.memory_space<vmem>>, vector<1x2x128xf32>
    %158 = vector.shape_cast %157 : vector<1x2x128xf32> to vector<2x128xf32>
    %159 = vector.shape_cast %153 : vector<2x128xf32> to vector<1x2x128xf32>
    tpu.vector_store %arg3[%156, %c0_64, %c0_65], %159 {strides = array<i32>} : memref<8x2x128xf32, #tpu.memory_space<vmem>>, vector<1x2x128xf32>,
    %c4_i32 = arith.constant 4 : i32
    %c0_66 = arith.constant 0 : index
    %c0_67 = arith.constant 0 : index
    %160 = vector.load %arg4[%c0_66, %c0_67] : memref<2x128xf32, #tpu.memory_space<vmem>>, vector<2x128xf32>
    %c0_68 = arith.constant 0 : index
    %c0_69 = arith.constant 0 : index
    %161 = vector.load %arg5[%c0_68, %c0_69] : memref<2x128xf32, #tpu.memory_space<vmem>>, vector<2x128xf32>
    %162 = arith.index_cast %c4_i32 : i32 to index
    %c0_70 = arith.constant 0 : index
    %c0_71 = arith.constant 0 : index
    %163 = vector.load %arg1[%162, %c0_70, %c0_71] : memref<8x2x512xf32, #tpu.memory_space<vmem>>, vector<1x2x512xf32>
    %164 = vector.shape_cast %163 : vector<1x2x512xf32> to vector<2x512xf32>
    %165 = arith.truncf %160 : vector<2x128xf32> to vector<2x128xbf16>
    %cst_72 = arith.constant dense<0.000000e+00> : vector<2x512xf32>
    %166 = tpu.matmul %165, %3, %cst_72 {dimension_numbers = #tpu.dot_dimension_numbers<[1], [0], [0], [1], [0, 0, 1, 1], [], []>} : vector<2x128xbf16>, vector<128x512xbf16>, vector<2x512xf32> -> vector<2x512xf32>
    %167 = arith.addf %164, %166 : vector<2x512xf32>
    %168 = vector.extract_strided_slice %167 {offsets = [0, 0], sizes = [2, 128], strides = [1, 1]} : vector<2x512xf32> to vector<2x128xf32>
    %169 = arith.negf %168 : vector<2x128xf32>
    %170 = math.exp %169 : vector<2x128xf32>
    %cst_73 = arith.constant 1.000000e+00 : f32
    %171 = vector.broadcast %cst_73 : f32 to vector<2x128xf32>
    %172 = arith.addf %171, %170 : vector<2x128xf32>
    %173 = arith.divf %171, %172 : vector<2x128xf32>
    %174 = vector.extract_strided_slice %167 {offsets = [0, 128], sizes = [2, 128], strides = [1, 1]} : vector<2x512xf32> to vector<2x128xf32>
    %175 = arith.negf %174 : vector<2x128xf32>
    %176 = math.exp %175 : vector<2x128xf32>
    %cst_74 = arith.constant 1.000000e+00 : f32
    %177 = vector.broadcast %cst_74 : f32 to vector<2x128xf32>
    %178 = arith.addf %177, %176 : vector<2x128xf32>
    %179 = arith.divf %177, %178 : vector<2x128xf32>
    %180 = vector.extract_strided_slice %167 {offsets = [0, 256], sizes = [2, 128], strides = [1, 1]} : vector<2x512xf32> to vector<2x128xf32>
    %181 = math.tanh %180 : vector<2x128xf32>
    %182 = vector.extract_strided_slice %167 {offsets = [0, 384], sizes = [2, 128], strides = [1, 1]} : vector<2x512xf32> to vector<2x128xf32>
    %183 = arith.negf %182 : vector<2x128xf32>
    %184 = math.exp %183 : vector<2x128xf32>
    %cst_75 = arith.constant 1.000000e+00 : f32
    %185 = vector.broadcast %cst_75 : f32 to vector<2x128xf32>
    %186 = arith.addf %185, %184 : vector<2x128xf32>
    %187 = arith.divf %185, %186 : vector<2x128xf32>
    %188 = arith.mulf %179, %161 : vector<2x128xf32>
    %189 = arith.mulf %173, %181 : vector<2x128xf32>
    %190 = arith.addf %188, %189 : vector<2x128xf32>
    %191 = math.tanh %190 : vector<2x128xf32>
    %192 = arith.mulf %187, %191 : vector<2x128xf32>
    %c0_76 = arith.constant 0 : index
    %c0_77 = arith.constant 0 : index
    %193 = vector.load %arg5[%c0_76, %c0_77] : memref<2x128xf32, #tpu.memory_space<vmem>>, vector<2x128xf32>
    tpu.vector_store %arg5[%c0_76, %c0_77], %190 {strides = array<i32>} : memref<2x128xf32, #tpu.memory_space<vmem>>, vector<2x128xf32>,
    %c0_78 = arith.constant 0 : index
    %c0_79 = arith.constant 0 : index
    %194 = vector.load %arg4[%c0_78, %c0_79] : memref<2x128xf32, #tpu.memory_space<vmem>>, vector<2x128xf32>
    tpu.vector_store %arg4[%c0_78, %c0_79], %192 {strides = array<i32>} : memref<2x128xf32, #tpu.memory_space<vmem>>, vector<2x128xf32>,
    %195 = arith.index_cast %c4_i32 : i32 to index
    %c0_80 = arith.constant 0 : index
    %c0_81 = arith.constant 0 : index
    %196 = vector.load %arg3[%195, %c0_80, %c0_81] : memref<8x2x128xf32, #tpu.memory_space<vmem>>, vector<1x2x128xf32>
    %197 = vector.shape_cast %196 : vector<1x2x128xf32> to vector<2x128xf32>
    %198 = vector.shape_cast %192 : vector<2x128xf32> to vector<1x2x128xf32>
    tpu.vector_store %arg3[%195, %c0_80, %c0_81], %198 {strides = array<i32>} : memref<8x2x128xf32, #tpu.memory_space<vmem>>, vector<1x2x128xf32>,
    %c5_i32 = arith.constant 5 : i32
    %c0_82 = arith.constant 0 : index
    %c0_83 = arith.constant 0 : index
    %199 = vector.load %arg4[%c0_82, %c0_83] : memref<2x128xf32, #tpu.memory_space<vmem>>, vector<2x128xf32>
    %c0_84 = arith.constant 0 : index
    %c0_85 = arith.constant 0 : index
    %200 = vector.load %arg5[%c0_84, %c0_85] : memref<2x128xf32, #tpu.memory_space<vmem>>, vector<2x128xf32>
    %201 = arith.index_cast %c5_i32 : i32 to index
    %c0_86 = arith.constant 0 : index
    %c0_87 = arith.constant 0 : index
    %202 = vector.load %arg1[%201, %c0_86, %c0_87] : memref<8x2x512xf32, #tpu.memory_space<vmem>>, vector<1x2x512xf32>
    %203 = vector.shape_cast %202 : vector<1x2x512xf32> to vector<2x512xf32>
    %204 = arith.truncf %199 : vector<2x128xf32> to vector<2x128xbf16>
    %cst_88 = arith.constant dense<0.000000e+00> : vector<2x512xf32>
    %205 = tpu.matmul %204, %3, %cst_88 {dimension_numbers = #tpu.dot_dimension_numbers<[1], [0], [0], [1], [0, 0, 1, 1], [], []>} : vector<2x128xbf16>, vector<128x512xbf16>, vector<2x512xf32> -> vector<2x512xf32>
    %206 = arith.addf %203, %205 : vector<2x512xf32>
    %207 = vector.extract_strided_slice %206 {offsets = [0, 0], sizes = [2, 128], strides = [1, 1]} : vector<2x512xf32> to vector<2x128xf32>
    %208 = arith.negf %207 : vector<2x128xf32>
    %209 = math.exp %208 : vector<2x128xf32>
    %cst_89 = arith.constant 1.000000e+00 : f32
    %210 = vector.broadcast %cst_89 : f32 to vector<2x128xf32>
    %211 = arith.addf %210, %209 : vector<2x128xf32>
    %212 = arith.divf %210, %211 : vector<2x128xf32>
    %213 = vector.extract_strided_slice %206 {offsets = [0, 128], sizes = [2, 128], strides = [1, 1]} : vector<2x512xf32> to vector<2x128xf32>
    %214 = arith.negf %213 : vector<2x128xf32>
    %215 = math.exp %214 : vector<2x128xf32>
    %cst_90 = arith.constant 1.000000e+00 : f32
    %216 = vector.broadcast %cst_90 : f32 to vector<2x128xf32>
    %217 = arith.addf %216, %215 : vector<2x128xf32>
    %218 = arith.divf %216, %217 : vector<2x128xf32>
    %219 = vector.extract_strided_slice %206 {offsets = [0, 256], sizes = [2, 128], strides = [1, 1]} : vector<2x512xf32> to vector<2x128xf32>
    %220 = math.tanh %219 : vector<2x128xf32>
    %221 = vector.extract_strided_slice %206 {offsets = [0, 384], sizes = [2, 128], strides = [1, 1]} : vector<2x512xf32> to vector<2x128xf32>
    %222 = arith.negf %221 : vector<2x128xf32>
    %223 = math.exp %222 : vector<2x128xf32>
    %cst_91 = arith.constant 1.000000e+00 : f32
    %224 = vector.broadcast %cst_91 : f32 to vector<2x128xf32>
    %225 = arith.addf %224, %223 : vector<2x128xf32>
    %226 = arith.divf %224, %225 : vector<2x128xf32>
    %227 = arith.mulf %218, %200 : vector<2x128xf32>
    %228 = arith.mulf %212, %220 : vector<2x128xf32>
    %229 = arith.addf %227, %228 : vector<2x128xf32>
    %230 = math.tanh %229 : vector<2x128xf32>
    %231 = arith.mulf %226, %230 : vector<2x128xf32>
    %c0_92 = arith.constant 0 : index
    %c0_93 = arith.constant 0 : index
    %232 = vector.load %arg5[%c0_92, %c0_93] : memref<2x128xf32, #tpu.memory_space<vmem>>, vector<2x128xf32>
    tpu.vector_store %arg5[%c0_92, %c0_93], %229 {strides = array<i32>} : memref<2x128xf32, #tpu.memory_space<vmem>>, vector<2x128xf32>,
    %c0_94 = arith.constant 0 : index
    %c0_95 = arith.constant 0 : index
    %233 = vector.load %arg4[%c0_94, %c0_95] : memref<2x128xf32, #tpu.memory_space<vmem>>, vector<2x128xf32>
    tpu.vector_store %arg4[%c0_94, %c0_95], %231 {strides = array<i32>} : memref<2x128xf32, #tpu.memory_space<vmem>>, vector<2x128xf32>,
    %234 = arith.index_cast %c5_i32 : i32 to index
    %c0_96 = arith.constant 0 : index
    %c0_97 = arith.constant 0 : index
    %235 = vector.load %arg3[%234, %c0_96, %c0_97] : memref<8x2x128xf32, #tpu.memory_space<vmem>>, vector<1x2x128xf32>
    %236 = vector.shape_cast %235 : vector<1x2x128xf32> to vector<2x128xf32>
    %237 = vector.shape_cast %231 : vector<2x128xf32> to vector<1x2x128xf32>
    tpu.vector_store %arg3[%234, %c0_96, %c0_97], %237 {strides = array<i32>} : memref<8x2x128xf32, #tpu.memory_space<vmem>>, vector<1x2x128xf32>,
    %c6_i32 = arith.constant 6 : i32
    %c0_98 = arith.constant 0 : index
    %c0_99 = arith.constant 0 : index
    %238 = vector.load %arg4[%c0_98, %c0_99] : memref<2x128xf32, #tpu.memory_space<vmem>>, vector<2x128xf32>
    %c0_100 = arith.constant 0 : index
    %c0_101 = arith.constant 0 : index
    %239 = vector.load %arg5[%c0_100, %c0_101] : memref<2x128xf32, #tpu.memory_space<vmem>>, vector<2x128xf32>
    %240 = arith.index_cast %c6_i32 : i32 to index
    %c0_102 = arith.constant 0 : index
    %c0_103 = arith.constant 0 : index
    %241 = vector.load %arg1[%240, %c0_102, %c0_103] : memref<8x2x512xf32, #tpu.memory_space<vmem>>, vector<1x2x512xf32>
    %242 = vector.shape_cast %241 : vector<1x2x512xf32> to vector<2x512xf32>
    %243 = arith.truncf %238 : vector<2x128xf32> to vector<2x128xbf16>
    %cst_104 = arith.constant dense<0.000000e+00> : vector<2x512xf32>
    %244 = tpu.matmul %243, %3, %cst_104 {dimension_numbers = #tpu.dot_dimension_numbers<[1], [0], [0], [1], [0, 0, 1, 1], [], []>} : vector<2x128xbf16>, vector<128x512xbf16>, vector<2x512xf32> -> vector<2x512xf32>
    %245 = arith.addf %242, %244 : vector<2x512xf32>
    %246 = vector.extract_strided_slice %245 {offsets = [0, 0], sizes = [2, 128], strides = [1, 1]} : vector<2x512xf32> to vector<2x128xf32>
    %247 = arith.negf %246 : vector<2x128xf32>
    %248 = math.exp %247 : vector<2x128xf32>
    %cst_105 = arith.constant 1.000000e+00 : f32
    %249 = vector.broadcast %cst_105 : f32 to vector<2x128xf32>
    %250 = arith.addf %249, %248 : vector<2x128xf32>
    %251 = arith.divf %249, %250 : vector<2x128xf32>
    %252 = vector.extract_strided_slice %245 {offsets = [0, 128], sizes = [2, 128], strides = [1, 1]} : vector<2x512xf32> to vector<2x128xf32>
    %253 = arith.negf %252 : vector<2x128xf32>
    %254 = math.exp %253 : vector<2x128xf32>
    %cst_106 = arith.constant 1.000000e+00 : f32
    %255 = vector.broadcast %cst_106 : f32 to vector<2x128xf32>
    %256 = arith.addf %255, %254 : vector<2x128xf32>
    %257 = arith.divf %255, %256 : vector<2x128xf32>
    %258 = vector.extract_strided_slice %245 {offsets = [0, 256], sizes = [2, 128], strides = [1, 1]} : vector<2x512xf32> to vector<2x128xf32>
    %259 = math.tanh %258 : vector<2x128xf32>
    %260 = vector.extract_strided_slice %245 {offsets = [0, 384], sizes = [2, 128], strides = [1, 1]} : vector<2x512xf32> to vector<2x128xf32>
    %261 = arith.negf %260 : vector<2x128xf32>
    %262 = math.exp %261 : vector<2x128xf32>
    %cst_107 = arith.constant 1.000000e+00 : f32
    %263 = vector.broadcast %cst_107 : f32 to vector<2x128xf32>
    %264 = arith.addf %263, %262 : vector<2x128xf32>
    %265 = arith.divf %263, %264 : vector<2x128xf32>
    %266 = arith.mulf %257, %239 : vector<2x128xf32>
    %267 = arith.mulf %251, %259 : vector<2x128xf32>
    %268 = arith.addf %266, %267 : vector<2x128xf32>
    %269 = math.tanh %268 : vector<2x128xf32>
    %270 = arith.mulf %265, %269 : vector<2x128xf32>
    %c0_108 = arith.constant 0 : index
    %c0_109 = arith.constant 0 : index
    %271 = vector.load %arg5[%c0_108, %c0_109] : memref<2x128xf32, #tpu.memory_space<vmem>>, vector<2x128xf32>
    tpu.vector_store %arg5[%c0_108, %c0_109], %268 {strides = array<i32>} : memref<2x128xf32, #tpu.memory_space<vmem>>, vector<2x128xf32>,
    %c0_110 = arith.constant 0 : index
    %c0_111 = arith.constant 0 : index
    %272 = vector.load %arg4[%c0_110, %c0_111] : memref<2x128xf32, #tpu.memory_space<vmem>>, vector<2x128xf32>
    tpu.vector_store %arg4[%c0_110, %c0_111], %270 {strides = array<i32>} : memref<2x128xf32, #tpu.memory_space<vmem>>, vector<2x128xf32>,
    %273 = arith.index_cast %c6_i32 : i32 to index
    %c0_112 = arith.constant 0 : index
    %c0_113 = arith.constant 0 : index
    %274 = vector.load %arg3[%273, %c0_112, %c0_113] : memref<8x2x128xf32, #tpu.memory_space<vmem>>, vector<1x2x128xf32>
    %275 = vector.shape_cast %274 : vector<1x2x128xf32> to vector<2x128xf32>
    %276 = vector.shape_cast %270 : vector<2x128xf32> to vector<1x2x128xf32>
    tpu.vector_store %arg3[%273, %c0_112, %c0_113], %276 {strides = array<i32>} : memref<8x2x128xf32, #tpu.memory_space<vmem>>, vector<1x2x128xf32>,
    %c7_i32 = arith.constant 7 : i32
    %c0_114 = arith.constant 0 : index
    %c0_115 = arith.constant 0 : index
    %277 = vector.load %arg4[%c0_114, %c0_115] : memref<2x128xf32, #tpu.memory_space<vmem>>, vector<2x128xf32>
    %c0_116 = arith.constant 0 : index
    %c0_117 = arith.constant 0 : index
    %278 = vector.load %arg5[%c0_116, %c0_117] : memref<2x128xf32, #tpu.memory_space<vmem>>, vector<2x128xf32>
    %279 = arith.index_cast %c7_i32 : i32 to index
    %c0_118 = arith.constant 0 : index
    %c0_119 = arith.constant 0 : index
    %280 = vector.load %arg1[%279, %c0_118, %c0_119] : memref<8x2x512xf32, #tpu.memory_space<vmem>>, vector<1x2x512xf32>
    %281 = vector.shape_cast %280 : vector<1x2x512xf32> to vector<2x512xf32>
    %282 = arith.truncf %277 : vector<2x128xf32> to vector<2x128xbf16>
    %cst_120 = arith.constant dense<0.000000e+00> : vector<2x512xf32>
    %283 = tpu.matmul %282, %3, %cst_120 {dimension_numbers = #tpu.dot_dimension_numbers<[1], [0], [0], [1], [0, 0, 1, 1], [], []>} : vector<2x128xbf16>, vector<128x512xbf16>, vector<2x512xf32> -> vector<2x512xf32>
    %284 = arith.addf %281, %283 : vector<2x512xf32>
    %285 = vector.extract_strided_slice %284 {offsets = [0, 0], sizes = [2, 128], strides = [1, 1]} : vector<2x512xf32> to vector<2x128xf32>
    %286 = arith.negf %285 : vector<2x128xf32>
    %287 = math.exp %286 : vector<2x128xf32>
    %cst_121 = arith.constant 1.000000e+00 : f32
    %288 = vector.broadcast %cst_121 : f32 to vector<2x128xf32>
    %289 = arith.addf %288, %287 : vector<2x128xf32>
    %290 = arith.divf %288, %289 : vector<2x128xf32>
    %291 = vector.extract_strided_slice %284 {offsets = [0, 128], sizes = [2, 128], strides = [1, 1]} : vector<2x512xf32> to vector<2x128xf32>
    %292 = arith.negf %291 : vector<2x128xf32>
    %293 = math.exp %292 : vector<2x128xf32>
    %cst_122 = arith.constant 1.000000e+00 : f32
    %294 = vector.broadcast %cst_122 : f32 to vector<2x128xf32>
    %295 = arith.addf %294, %293 : vector<2x128xf32>
    %296 = arith.divf %294, %295 : vector<2x128xf32>
    %297 = vector.extract_strided_slice %284 {offsets = [0, 256], sizes = [2, 128], strides = [1, 1]} : vector<2x512xf32> to vector<2x128xf32>
    %298 = math.tanh %297 : vector<2x128xf32>
    %299 = vector.extract_strided_slice %284 {offsets = [0, 384], sizes = [2, 128], strides = [1, 1]} : vector<2x512xf32> to vector<2x128xf32>
    %300 = arith.negf %299 : vector<2x128xf32>
    %301 = math.exp %300 : vector<2x128xf32>
    %cst_123 = arith.constant 1.000000e+00 : f32
    %302 = vector.broadcast %cst_123 : f32 to vector<2x128xf32>
    %303 = arith.addf %302, %301 : vector<2x128xf32>
    %304 = arith.divf %302, %303 : vector<2x128xf32>
    %305 = arith.mulf %296, %278 : vector<2x128xf32>
    %306 = arith.mulf %290, %298 : vector<2x128xf32>
    %307 = arith.addf %305, %306 : vector<2x128xf32>
    %308 = math.tanh %307 : vector<2x128xf32>
    %309 = arith.mulf %304, %308 : vector<2x128xf32>
    %c0_124 = arith.constant 0 : index
    %c0_125 = arith.constant 0 : index
    %310 = vector.load %arg5[%c0_124, %c0_125] : memref<2x128xf32, #tpu.memory_space<vmem>>, vector<2x128xf32>
    tpu.vector_store %arg5[%c0_124, %c0_125], %307 {strides = array<i32>} : memref<2x128xf32, #tpu.memory_space<vmem>>, vector<2x128xf32>,
    %c0_126 = arith.constant 0 : index
    %c0_127 = arith.constant 0 : index
    %311 = vector.load %arg4[%c0_126, %c0_127] : memref<2x128xf32, #tpu.memory_space<vmem>>, vector<2x128xf32>
    tpu.vector_store %arg4[%c0_126, %c0_127], %309 {strides = array<i32>} : memref<2x128xf32, #tpu.memory_space<vmem>>, vector<2x128xf32>,
    %312 = arith.index_cast %c7_i32 : i32 to index
    %c0_128 = arith.constant 0 : index
    %c0_129 = arith.constant 0 : index
    %313 = vector.load %arg3[%312, %c0_128, %c0_129] : memref<8x2x128xf32, #tpu.memory_space<vmem>>, vector<1x2x128xf32>
    %314 = vector.shape_cast %313 : vector<1x2x128xf32> to vector<2x128xf32>
    %315 = vector.shape_cast %309 : vector<2x128xf32> to vector<1x2x128xf32>
    tpu.vector_store %arg3[%312, %c0_128, %c0_129], %315 {strides = array<i32>} : memref<8x2x128xf32, #tpu.memory_space<vmem>>, vector<1x2x128xf32>,
    %c8_i32 = arith.constant 8 : i32
    return
  }
  func.func @transform_0(%arg0: i32) -> (i32, i32, i32) {
    %c0_i32 = arith.constant 0 : i32
    %c0_i32_0 = arith.constant 0 : i32
    %c0_i32_1 = arith.constant 0 : i32
    return %arg0, %c0_i32, %c0_i32_0 : i32, i32, i32
  }
  func.func @transform_1(%arg0: i32) -> (i32, i32) {
    %c0_i32 = arith.constant 0 : i32
    %c0_i32_0 = arith.constant 0 : i32
    %c0_i32_1 = arith.constant 0 : i32
    return %c0_i32, %c0_i32_0 : i32, i32
  }
  func.func @transform_2(%arg0: i32) -> (i32, i32, i32) {
    %c0_i32 = arith.constant 0 : i32
    %c0_i32_0 = arith.constant 0 : i32
    %c0_i32_1 = arith.constant 0 : i32
    return %arg0, %c0_i32, %c0_i32_0 : i32, i32, i32
  }
}

</mosaic_0001>

<llo_original>
// kernel: a_call__.2
$region0: #{a_call__.2}
  #allocation0 [shape = 'u32[]', space=smem, size = 0x4, offset = 0x4, fixed_abs, tag = 'smem constant byte address 0x4 - core index']
  #allocation1 [shape = 'u32[144,128]{1,0:T(1,128)}', space=vmem, size = 0x12000, scoped, tag = 'internal scratch']
  #allocation2 [shape = 'f32[2,128]{1,0:T(2,128)}', space=vmem, size = 0x400, scoped, tag = 'scratch operand']
  #allocation3 [shape = 'f32[2,128]{1,0:T(2,128)}', space=vmem, size = 0x400, scoped, tag = 'scratch operand']
  %s0 = inlined_call_operand.vmem [shape: f32[8,2,512], index: 0, kind: input, shape index: {}]
  %s1 = inlined_call_operand.vmem [shape: bf16[128,512], index: 1, kind: input, shape index: {}]
  %s2 = inlined_call_operand.vmem [shape: f32[8,2,128], index: 2, kind: output, shape index: {}]
  %s3 = sld [smem:[#allocation0]]
  $region22: #{a_call__.2} parent=0
    _
  %s5 = ssub.s32 1, %s3
  %s6 = scalar_select 0, %s5, %s3
  // Predicated region
  $region2: #{a_call__.2} parent=0 // pred_check
    _
  $region3: #{a_call__.2} parent=0 // pred_check_branch
    %8 = sbr.rel (0) target = $region5
  $region4: #{a_call__.2} parent=0 // pred_region
    _
  $region5: #{a_call__.2} parent=0 // pred_fallthru
    _
  // Predicated region
  $region6: #{a_call__.2} parent=0 // pred_check
    _
  $region7: #{a_call__.2} parent=0 // pred_check_branch
    %10 = sbr.rel (0) target = $region9
  $region8: #{a_call__.2} parent=0 // pred_region
    _
  $region9: #{a_call__.2} parent=0 // pred_fallthru
    _
  %p12 = scmp.eq.s32.totalorder 0, 0
  // Predicated region
  $region10: #{a_call__.2} parent=0 // pred_check
    %p13 = pneg %p12
  $region11: #{a_call__.2} parent=0 // pred_check_branch
    %15 = sbr.rel (%p13) target = $region13
  $region12: #{a_call__.2} parent=0 // pred_region
    %16 = vst [vmem:[#allocation2] sm:$0x3] 0.0
    %17 = vst [vmem:[#allocation3] sm:$0x3] 0.0
  $region13: #{a_call__.2} parent=0 // pred_fallthru
    _
  %v18 = vld [vmem:[%s1] sm:$0xff]
  %v19 = vld [vmem:[%s1 + $0x8] sm:$0xff]
  %v20 = vld [vmem:[%s1 + $0x10] sm:$0xff]
  %v21 = vld [vmem:[%s1 + $0x18] sm:$0xff]
  %v22 = vld [vmem:[%s1 + $0x20] sm:$0xff]
  %v23 = vld [vmem:[%s1 + $0x28] sm:$0xff]
  %v24 = vld [vmem:[%s1 + $0x30] sm:$0xff]
  %v25 = vld [vmem:[%s1 + $0x38] sm:$0xff]
  %v26 = vld [vmem:[%s1 + $0x40] sm:$0xff]
  %v27 = vld [vmem:[%s1 + $0x48] sm:$0xff]
  %v28 = vld [vmem:[%s1 + $0x50] sm:$0xff]
  %v29 = vld [vmem:[%s1 + $0x58] sm:$0xff]
  %v30 = vld [vmem:[%s1 + $0x60] sm:$0xff]
  %v31 = vld [vmem:[%s1 + $0x68] sm:$0xff]
  %v32 = vld [vmem:[%s1 + $0x70] sm:$0xff]
  %v33 = vld [vmem:[%s1 + $0x78] sm:$0xff]
  %v34 = vld [vmem:[%s1 + $0x80] sm:$0xff]
  %v35 = vld [vmem:[%s1 + $0x88] sm:$0xff]
  %v36 = vld [vmem:[%s1 + $0x90] sm:$0xff]
  %v37 = vld [vmem:[%s1 + $0x98] sm:$0xff]
  %v38 = vld [vmem:[%s1 + $0xa0] sm:$0xff]
  %v39 = vld [vmem:[%s1 + $0xa8] sm:$0xff]
  %v40 = vld [vmem:[%s1 + $0xb0] sm:$0xff]
  %v41 = vld [vmem:[%s1 + $0xb8] sm:$0xff]
  %v42 = vld [vmem:[%s1 + $0xc0] sm:$0xff]
  %v43 = vld [vmem:[%s1 + $0xc8] sm:$0xff]
  %v44 = vld [vmem:[%s1 + $0xd0] sm:$0xff]
  %v45 = vld [vmem:[%s1 + $0xd8] sm:$0xff]
  %v46 = vld [vmem:[%s1 + $0xe0] sm:$0xff]
  %v47 = vld [vmem:[%s1 + $0xe8] sm:$0xff]
  %v48 = vld [vmem:[%s1 + $0xf0] sm:$0xff]
  %v49 = vld [vmem:[%s1 + $0xf8] sm:$0xff]
  %v50 = vld [vmem:[#allocation2] sm:$0x3]
  %v51 = vld [vmem:[#allocation3] sm:$0x3]
  %v52 = vld [vmem:[%s0] sm:$0xff]
  %v53 = vpack.c.bf16 %v50, %v50
  %v86 = vunpack.c.l.b16 %v18
  %v87 = vunpack.c.h.b16 %v18
  %v88 = vunpack.c.l.b16 %v19
  %v89 = vunpack.c.h.b16 %v19
  %v90 = vunpack.c.l.b16 %v20
  %v91 = vunpack.c.h.b16 %v20
  %v92 = vunpack.c.l.b16 %v21
  %v93 = vunpack.c.h.b16 %v21
  %v94 = vunpack.c.l.b16 %v22
  %v95 = vunpack.c.h.b16 %v22
  %v96 = vunpack.c.l.b16 %v23
  %v97 = vunpack.c.h.b16 %v23
  %v98 = vunpack.c.l.b16 %v24
  %v99 = vunpack.c.h.b16 %v24
  %v100 = vunpack.c.l.b16 %v25
  %v101 = vunpack.c.h.b16 %v25
  %v102 = vunpack.c.l.b16 %v26
  %v103 = vunpack.c.h.b16 %v26
  %v104 = vunpack.c.l.b16 %v27
  %v105 = vunpack.c.h.b16 %v27
  %v106 = vunpack.c.l.b16 %v28
  %v107 = vunpack.c.h.b16 %v28
  %v108 = vunpack.c.l.b16 %v29
  %v109 = vunpack.c.h.b16 %v29
  %v110 = vunpack.c.l.b16 %v30
  %v111 = vunpack.c.h.b16 %v30
  %v112 = vunpack.c.l.b16 %v31
  %v113 = vunpack.c.h.b16 %v31
  %v114 = vunpack.c.l.b16 %v32
  %v115 = vunpack.c.h.b16 %v32
  %v116 = vunpack.c.l.b16 %v33
  %v117 = vunpack.c.h.b16 %v33
  %v118 = vunpack.c.l.b16 %v34
  %v119 = vunpack.c.h.b16 %v34
  %v120 = vunpack.c.l.b16 %v35
  %v121 = vunpack.c.h.b16 %v35
  %v122 = vunpack.c.l.b16 %v36
  %v123 = vunpack.c.h.b16 %v36
  %v124 = vunpack.c.l.b16 %v37
  %v125 = vunpack.c.h.b16 %v37
  %v126 = vunpack.c.l.b16 %v38
  %v127 = vunpack.c.h.b16 %v38
  %v128 = vunpack.c.l.b16 %v39
  %v129 = vunpack.c.h.b16 %v39
  %v130 = vunpack.c.l.b16 %v40
  %v131 = vunpack.c.h.b16 %v40
  %v132 = vunpack.c.l.b16 %v41
  %v133 = vunpack.c.h.b16 %v41
  %v134 = vunpack.c.l.b16 %v42
  %v135 = vunpack.c.h.b16 %v42
  %v136 = vunpack.c.l.b16 %v43
  %v137 = vunpack.c.h.b16 %v43
  %v138 = vunpack.c.l.b16 %v44
  %v139 = vunpack.c.h.b16 %v44
  %v140 = vunpack.c.l.b16 %v45
  %v141 = vunpack.c.h.b16 %v45
  %v142 = vunpack.c.l.b16 %v46
  %v143 = vunpack.c.h.b16 %v46
  %v144 = vunpack.c.l.b16 %v47
  %v145 = vunpack.c.h.b16 %v47
  %v146 = vunpack.c.l.b16 %v48
  %v147 = vunpack.c.h.b16 %v48
  %v148 = vunpack.c.l.b16 %v49
  %v149 = vunpack.c.h.b16 %v49
  %v150 = vpack.c.b16 %v90, %v86
  %v151 = vpack.c.b16 %v91, %v87
  %v152 = vpack.c.b16 %v92, %v88
  %v153 = vpack.c.b16 %v93, %v89
  %v154 = vpack.c.b16 %v98, %v94
  %v155 = vpack.c.b16 %v99, %v95
  %v156 = vpack.c.b16 %v100, %v96
  %v157 = vpack.c.b16 %v101, %v97
  %v158 = vpack.c.b16 %v106, %v102
  %v159 = vpack.c.b16 %v107, %v103
  %v160 = vpack.c.b16 %v108, %v104
  %v161 = vpack.c.b16 %v109, %v105
  %v162 = vpack.c.b16 %v114, %v110
  %v163 = vpack.c.b16 %v115, %v111
  %v164 = vpack.c.b16 %v116, %v112
  %v165 = vpack.c.b16 %v117, %v113
  %v166 = vpack.c.b16 %v122, %v118
  %v167 = vpack.c.b16 %v123, %v119
  %v168 = vpack.c.b16 %v124, %v120
  %v169 = vpack.c.b16 %v125, %v121
  %v170 = vpack.c.b16 %v130, %v126
  %v171 = vpack.c.b16 %v131, %v127
  %v172 = vpack.c.b16 %v132, %v128
  %v173 = vpack.c.b16 %v133, %v129
  %v174 = vpack.c.b16 %v138, %v134
  %v175 = vpack.c.b16 %v139, %v135
  %v176 = vpack.c.b16 %v140, %v136
  %v177 = vpack.c.b16 %v141, %v137
  %v178 = vpack.c.b16 %v146, %v142
  %v179 = vpack.c.b16 %v147, %v143
  %v180 = vpack.c.b16 %v148, %v144
  %v181 = vpack.c.b16 %v149, %v145
  %214 = vmatprep.subr.bf16.mxu0 %v179
  %215 = vmatpush1.bf16.msra.mxu0 %v178
  %216 = vmatprep.subr.bf16.mxu0 %v175
  %217 = vmatpush1.bf16.msra.mxu0 %v174
  %218 = vmatprep.subr.bf16.mxu0 %v171
  %219 = vmatpush1.bf16.msra.mxu0 %v170
  %220 = vmatprep.subr.bf16.mxu0 %v167
  %221 = vmatpush1.bf16.msra.mxu0 %v166
  %222 = vmatprep.subr.bf16.mxu0 %v163
  %223 = vmatpush1.bf16.msra.mxu0 %v162
  %224 = vmatprep.subr.bf16.mxu0 %v159
  %225 = vmatpush1.bf16.msra.mxu0 %v158
  %226 = vmatprep.subr.bf16.mxu0 %v155
  %227 = vmatpush1.bf16.msra.mxu0 %v154
  %228 = vmatprep.subr.bf16.mxu0 %v151
  %229 = vmatpush1.bf16.msra.mxu0 %v150
  %230 = vmatprep.subr.bf16.mxu0 0
  %231 = vmatpush2.bf16.msra.mxu0 0
  %232 = vmatprep.subr.bf16.mxu0 0
  %233 = vmatpush2.bf16.msra.mxu0 0
  %234 = vmatprep.subr.bf16.mxu0 0
  %235 = vmatpush2.bf16.msra.mxu0 0
  %236 = vmatprep.subr.bf16.mxu0 0
  %237 = vmatpush2.bf16.msra.mxu0 0
  %238 = vmatprep.subr.bf16.mxu0 0
  %239 = vmatpush2.bf16.msra.mxu0 0
  %240 = vmatprep.subr.bf16.mxu0 0
  %241 = vmatpush2.bf16.msra.mxu0 0
  %242 = vmatprep.subr.bf16.mxu0 0
  %243 = vmatpush2.bf16.msra.mxu0 0
  %244 = vmatprep.subr.bf16.mxu0 0
  %245 = vmatpush2.bf16.msra.mxu0 0
  %246 = vmatprep.mubr.bf16.mxu0 0
  %247 = vmatmul.mubr.bf16.gmra.mxu0 %v53
  %v248 = vpop.f32.mrf.mxu0
  %v249 = vadd.f32 0.0, %v248
  %v250 = vpop.f32.mrf.mxu0
  %v251 = vadd.f32 0.0, %v250
  %v252 = vpop.f32.mrf.mxu0
  %v253 = vpop.f32.mrf.mxu0
  %254 = vdwg.mxu0
  %255 = vmatprep.subr.bf16.mxu0 %v181
  %256 = vmatpush1.bf16.msra.mxu0 %v180
  %257 = vmatprep.subr.bf16.mxu0 %v177
  %258 = vmatpush1.bf16.msra.mxu0 %v176
  %259 = vmatprep.subr.bf16.mxu0 %v173
  %260 = vmatpush1.bf16.msra.mxu0 %v172
  %261 = vmatprep.subr.bf16.mxu0 %v169
  %262 = vmatpush1.bf16.msra.mxu0 %v168
  %263 = vmatprep.subr.bf16.mxu0 %v165
  %264 = vmatpush1.bf16.msra.mxu0 %v164
  %265 = vmatprep.subr.bf16.mxu0 %v161
  %266 = vmatpush1.bf16.msra.mxu0 %v160
  %267 = vmatprep.subr.bf16.mxu0 %v157
  %268 = vmatpush1.bf16.msra.mxu0 %v156
  %269 = vmatprep.subr.bf16.mxu0 %v153
  %270 = vmatpush1.bf16.msra.mxu0 %v152
  %271 = vmatprep.subr.bf16.mxu0 0
  %272 = vmatpush2.bf16.msra.mxu0 0
  %273 = vmatprep.subr.bf16.mxu0 0
  %274 = vmatpush2.bf16.msra.mxu0 0
  %275 = vmatprep.subr.bf16.mxu0 0
  %276 = vmatpush2.bf16.msra.mxu0 0
  %277 = vmatprep.subr.bf16.mxu0 0
  %278 = vmatpush2.bf16.msra.mxu0 0
  %279 = vmatprep.subr.bf16.mxu0 0
  %280 = vmatpush2.bf16.msra.mxu0 0
  %281 = vmatprep.subr.bf16.mxu0 0
  %282 = vmatpush2.bf16.msra.mxu0 0
  %283 = vmatprep.subr.bf16.mxu0 0
  %284 = vmatpush2.bf16.msra.mxu0 0
  %285 = vmatprep.subr.bf16.mxu0 0
  %286 = vmatpush2.bf16.msra.mxu0 0
  %287 = vmatprep.mubr.bf16.mxu0 0
  %288 = vmatmul.mubr.bf16.gmra.mxu0 %v53
  %v289 = vpop.f32.mrf.mxu0
  %v290 = vadd.f32 0.0, %v289
  %v291 = vpop.f32.mrf.mxu0
  %v292 = vadd.f32 0.0, %v291
  %v293 = vpop.f32.mrf.mxu0
  %v294 = vpop.f32.mrf.mxu0
  %295 = vdwg.mxu0
  %v300 = vcombine.low %v249, %v251
  %v301 = vcombine.low %v290, %v292
  %v303 = vunpack.c.l.s4 1983009808
  %v304 = vunpack.c.0.s8 %v303
  %v305 = vlaneseq
  %v306 = vshrl.u32 %v305, 7
  %v307 = vsub.s32 %v304, %v306
  %v308 = vrot.slane %v300, %v307
  %v310 = vunpack.c.l.s4 1983009808
  %v311 = vunpack.c.0.s8 %v310
  %v312 = vlaneseq
  %v313 = vshrl.u32 %v312, 7
  %v314 = vsub.s32 %v311, %v313
  %v315 = vrot.slane %v301, %v314
  %v316 = vcombine.low %v308, %v315
  %v318 = vadd.f32 %v52, %v316
  %v319 = vxor.u32 %v318, 2147483648
  %v320 = vmul.f32 %v319, 1.442695
  %v321 = vpow.pop %v320
  %v322 = vadd.f32 %v321, 1.0
  %v323 = vrcp.pop %v322
  %v324 = vmul.f32 1.0, %v323
  %v326 = vrot.slane %v318, 2
  %v328 = vxor.u32 %v326, 2147483648
  %v329 = vmul.f32 %v328, 1.442695
  %v330 = vpow.pop %v329
  %v331 = vadd.f32 %v330, 1.0
  %v332 = vrcp.pop %v331
  %v333 = vmul.f32 1.0, %v332
  %v334 = vrot.slane %v318, 4
  %v336 = vtanh.pop %v334
  %v337 = vrot.slane %v318, 6
  %v339 = vxor.u32 %v337, 2147483648
  %v340 = vmul.f32 %v339, 1.442695
  %v341 = vpow.pop %v340
  %v342 = vadd.f32 %v341, 1.0
  %v343 = vrcp.pop %v342
  %v344 = vmul.f32 1.0, %v343
  %v345 = vmul.f32 %v333, %v51
  %v346 = vmul.f32 %v324, %v336
  %v347 = vadd.f32 %v345, %v346
  %v348 = vtanh.pop %v347
  %v349 = vmul.f32 %v344, %v348
  %350 = vst [vmem:[#allocation3] sm:$0x3] %v347
  %351 = vst [vmem:[#allocation2] sm:$0x3] %v349
  %352 = vst [vmem:[%s2] sm:$0x3] %v349
  %v353 = vld [vmem:[#allocation2] sm:$0x3]
  %v354 = vld [vmem:[#allocation3] sm:$0x3]
  %s355 = scalar_lea.vmem %s0, 8
  %v356 = vld [vmem:[%s355] sm:$0xff]
  %v357 = vpack.c.bf16 %v353, %v353
  %358 = vmatprep.subr.bf16.mxu0 %v179
  %359 = vmatpush1.bf16.msra.mxu0 %v178
  %360 = vmatprep.subr.bf16.mxu0 %v175
  %361 = vmatpush1.bf16.msra.mxu0 %v174
  %362 = vmatprep.subr.bf16.mxu0 %v171
  %363 = vmatpush1.bf16.msra.mxu0 %v170
  %364 = vmatprep.subr.bf16.mxu0 %v167
  %365 = vmatpush1.bf16.msra.mxu0 %v166
  %366 = vmatprep.subr.bf16.mxu0 %v163
  %367 = vmatpush1.bf16.msra.mxu0 %v162
  %368 = vmatprep.subr.bf16.mxu0 %v159
  %369 = vmatpush1.bf16.msra.mxu0 %v158
  %370 = vmatprep.subr.bf16.mxu0 %v155
  %371 = vmatpush1.bf16.msra.mxu0 %v154
  %372 = vmatprep.subr.bf16.mxu0 %v151
  %373 = vmatpush1.bf16.msra.mxu0 %v150
  %374 = vmatprep.subr.bf16.mxu0 0
  %375 = vmatpush2.bf16.msra.mxu0 0
  %376 = vmatprep.subr.bf16.mxu0 0
  %377 = vmatpush2.bf16.msra.mxu0 0
  %378 = vmatprep.subr.bf16.mxu0 0
  %379 = vmatpush2.bf16.msra.mxu0 0
  %380 = vmatprep.subr.bf16.mxu0 0
  %381 = vmatpush2.bf16.msra.mxu0 0
  %382 = vmatprep.subr.bf16.mxu0 0
  %383 = vmatpush2.bf16.msra.mxu0 0
  %384 = vmatprep.subr.bf16.mxu0 0
  %385 = vmatpush2.bf16.msra.mxu0 0
  %386 = vmatprep.subr.bf16.mxu0 0
  %387 = vmatpush2.bf16.msra.mxu0 0
  %388 = vmatprep.subr.bf16.mxu0 0
  %389 = vmatpush2.bf16.msra.mxu0 0
  %390 = vmatprep.mubr.bf16.mxu0 0
  %391 = vmatmul.mubr.bf16.gmra.mxu0 %v357
  %v392 = vpop.f32.mrf.mxu0
  %v393 = vadd.f32 0.0, %v392
  %v394 = vpop.f32.mrf.mxu0
  %v395 = vadd.f32 0.0, %v394
  %v396 = vpop.f32.mrf.mxu0
  %v397 = vpop.f32.mrf.mxu0
  %398 = vdwg.mxu0
  %399 = vmatprep.subr.bf16.mxu0 %v181
  %400 = vmatpush1.bf16.msra.mxu0 %v180
  %401 = vmatprep.subr.bf16.mxu0 %v177
  %402 = vmatpush1.bf16.msra.mxu0 %v176
  %403 = vmatprep.subr.bf16.mxu0 %v173
  %404 = vmatpush1.bf16.msra.mxu0 %v172
  %405 = vmatprep.subr.bf16.mxu0 %v169
  %406 = vmatpush1.bf16.msra.mxu0 %v168
  %407 = vmatprep.subr.bf16.mxu0 %v165
  %408 = vmatpush1.bf16.msra.mxu0 %v164
  %409 = vmatprep.subr.bf16.mxu0 %v161
  %410 = vmatpush1.bf16.msra.mxu0 %v160
  %411 = vmatprep.subr.bf16.mxu0 %v157
  %412 = vmatpush1.bf16.msra.mxu0 %v156
  %413 = vmatprep.subr.bf16.mxu0 %v153
  %414 = vmatpush1.bf16.msra.mxu0 %v152
  %415 = vmatprep.subr.bf16.mxu0 0
  %416 = vmatpush2.bf16.msra.mxu0 0
  %417 = vmatprep.subr.bf16.mxu0 0
  %418 = vmatpush2.bf16.msra.mxu0 0
  %419 = vmatprep.subr.bf16.mxu0 0
  %420 = vmatpush2.bf16.msra.mxu0 0
  %421 = vmatprep.subr.bf16.mxu0 0
  %422 = vmatpush2.bf16.msra.mxu0 0
  %423 = vmatprep.subr.bf16.mxu0 0
  %424 = vmatpush2.bf16.msra.mxu0 0
  %425 = vmatprep.subr.bf16.mxu0 0
  %426 = vmatpush2.bf16.msra.mxu0 0
  %427 = vmatprep.subr.bf16.mxu0 0
  %428 = vmatpush2.bf16.msra.mxu0 0
  %429 = vmatprep.subr.bf16.mxu0 0
  %430 = vmatpush2.bf16.msra.mxu0 0
  %431 = vmatprep.mubr.bf16.mxu0 0
  %432 = vmatmul.mubr.bf16.gmra.mxu0 %v357
  %v433 = vpop.f32.mrf.mxu0
  %v434 = vadd.f32 0.0, %v433
  %v435 = vpop.f32.mrf.mxu0
  %v436 = vadd.f32 0.0, %v435
  %v437 = vpop.f32.mrf.mxu0
  %v438 = vpop.f32.mrf.mxu0
  %439 = vdwg.mxu0
  %v444 = vcombine.low %v393, %v395
  %v445 = vcombine.low %v434, %v436
  %v447 = vunpack.c.l.s4 1983009808
  %v448 = vunpack.c.0.s8 %v447
  %v449 = vlaneseq
  %v450 = vshrl.u32 %v449, 7
  %v451 = vsub.s32 %v448, %v450
  %v452 = vrot.slane %v444, %v451
  %v454 = vunpack.c.l.s4 1983009808
  %v455 = vunpack.c.0.s8 %v454
  %v456 = vlaneseq
  %v457 = vshrl.u32 %v456, 7
  %v458 = vsub.s32 %v455, %v457
  %v459 = vrot.slane %v445, %v458
  %v460 = vcombine.low %v452, %v459
  %v462 = vadd.f32 %v356, %v460
  %v463 = vxor.u32 %v462, 2147483648
  %v464 = vmul.f32 %v463, 1.442695
  %v465 = vpow.pop %v464
  %v466 = vadd.f32 %v465, 1.0
  %v467 = vrcp.pop %v466
  %v468 = vmul.f32 1.0, %v467
  %v470 = vrot.slane %v462, 2
  %v472 = vxor.u32 %v470, 2147483648
  %v473 = vmul.f32 %v472, 1.442695
  %v474 = vpow.pop %v473
  %v475 = vadd.f32 %v474, 1.0
  %v476 = vrcp.pop %v475
  %v477 = vmul.f32 1.0, %v476
  %v478 = vrot.slane %v462, 4
  %v480 = vtanh.pop %v478
  %v481 = vrot.slane %v462, 6
  %v483 = vxor.u32 %v481, 2147483648
  %v484 = vmul.f32 %v483, 1.442695
  %v485 = vpow.pop %v484
  %v486 = vadd.f32 %v485, 1.0
  %v487 = vrcp.pop %v486
  %v488 = vmul.f32 1.0, %v487
  %v489 = vmul.f32 %v477, %v354
  %v490 = vmul.f32 %v468, %v480
  %v491 = vadd.f32 %v489, %v490
  %v492 = vtanh.pop %v491
  %v493 = vmul.f32 %v488, %v492
  %494 = vst [vmem:[#allocation3] sm:$0x3] %v491
  %495 = vst [vmem:[#allocation2] sm:$0x3] %v493
  %s496 = scalar_lea.vmem %s2, 2
  %497 = vst [vmem:[%s496] sm:$0x3] %v493
  %v498 = vld [vmem:[#allocation2] sm:$0x3]
  %v499 = vld [vmem:[#allocation3] sm:$0x3]
  %s500 = scalar_lea.vmem %s0, 16
  %v501 = vld [vmem:[%s500] sm:$0xff]
  %v502 = vpack.c.bf16 %v498, %v498
  %503 = vmatprep.subr.bf16.mxu0 %v179
  %504 = vmatpush1.bf16.msra.mxu0 %v178
  %505 = vmatprep.subr.bf16.mxu0 %v175
  %506 = vmatpush1.bf16.msra.mxu0 %v174
  %507 = vmatprep.subr.bf16.mxu0 %v171
  %508 = vmatpush1.bf16.msra.mxu0 %v170
  %509 = vmatprep.subr.bf16.mxu0 %v167
  %510 = vmatpush1.bf16.msra.mxu0 %v166
  %511 = vmatprep.subr.bf16.mxu0 %v163
  %512 = vmatpush1.bf16.msra.mxu0 %v162
  %513 = vmatprep.subr.bf16.mxu0 %v159
  %514 = vmatpush1.bf16.msra.mxu0 %v158
  %515 = vmatprep.subr.bf16.mxu0 %v155
  %516 = vmatpush1.bf16.msra.mxu0 %v154
  %517 = vmatprep.subr.bf16.mxu0 %v151
  %518 = vmatpush1.bf16.msra.mxu0 %v150
  %519 = vmatprep.subr.bf16.mxu0 0
  %520 = vmatpush2.bf16.msra.mxu0 0
  %521 = vmatprep.subr.bf16.mxu0 0
  %522 = vmatpush2.bf16.msra.mxu0 0
  %523 = vmatprep.subr.bf16.mxu0 0
  %524 = vmatpush2.bf16.msra.mxu0 0
  %525 = vmatprep.subr.bf16.mxu0 0
  %526 = vmatpush2.bf16.msra.mxu0 0
  %527 = vmatprep.subr.bf16.mxu0 0
  %528 = vmatpush2.bf16.msra.mxu0 0
  %529 = vmatprep.subr.bf16.mxu0 0
  %530 = vmatpush2.bf16.msra.mxu0 0
  %531 = vmatprep.subr.bf16.mxu0 0
  %532 = vmatpush2.bf16.msra.mxu0 0
  %533 = vmatprep.subr.bf16.mxu0 0
  %534 = vmatpush2.bf16.msra.mxu0 0
  %535 = vmatprep.mubr.bf16.mxu0 0
  %536 = vmatmul.mubr.bf16.gmra.mxu0 %v502
  %v537 = vpop.f32.mrf.mxu0
  %v538 = vadd.f32 0.0, %v537
  %v539 = vpop.f32.mrf.mxu0
  %v540 = vadd.f32 0.0, %v539
  %v541 = vpop.f32.mrf.mxu0
  %v542 = vpop.f32.mrf.mxu0
  %543 = vdwg.mxu0
  %544 = vmatprep.subr.bf16.mxu0 %v181
  %545 = vmatpush1.bf16.msra.mxu0 %v180
  %546 = vmatprep.subr.bf16.mxu0 %v177
  %547 = vmatpush1.bf16.msra.mxu0 %v176
  %548 = vmatprep.subr.bf16.mxu0 %v173
  %549 = vmatpush1.bf16.msra.mxu0 %v172
  %550 = vmatprep.subr.bf16.mxu0 %v169
  %551 = vmatpush1.bf16.msra.mxu0 %v168
  %552 = vmatprep.subr.bf16.mxu0 %v165
  %553 = vmatpush1.bf16.msra.mxu0 %v164
  %554 = vmatprep.subr.bf16.mxu0 %v161
  %555 = vmatpush1.bf16.msra.mxu0 %v160
  %556 = vmatprep.subr.bf16.mxu0 %v157
  %557 = vmatpush1.bf16.msra.mxu0 %v156
  %558 = vmatprep.subr.bf16.mxu0 %v153
  %559 = vmatpush1.bf16.msra.mxu0 %v152
  %560 = vmatprep.subr.bf16.mxu0 0
  %561 = vmatpush2.bf16.msra.mxu0 0
  %562 = vmatprep.subr.bf16.mxu0 0
  %563 = vmatpush2.bf16.msra.mxu0 0
  %564 = vmatprep.subr.bf16.mxu0 0
  %565 = vmatpush2.bf16.msra.mxu0 0
  %566 = vmatprep.subr.bf16.mxu0 0
  %567 = vmatpush2.bf16.msra.mxu0 0
  %568 = vmatprep.subr.bf16.mxu0 0
  %569 = vmatpush2.bf16.msra.mxu0 0
  %570 = vmatprep.subr.bf16.mxu0 0
  %571 = vmatpush2.bf16.msra.mxu0 0
  %572 = vmatprep.subr.bf16.mxu0 0
  %573 = vmatpush2.bf16.msra.mxu0 0
  %574 = vmatprep.subr.bf16.mxu0 0
  %575 = vmatpush2.bf16.msra.mxu0 0
  %576 = vmatprep.mubr.bf16.mxu0 0
  %577 = vmatmul.mubr.bf16.gmra.mxu0 %v502
  %v578 = vpop.f32.mrf.mxu0
  %v579 = vadd.f32 0.0, %v578
  %v580 = vpop.f32.mrf.mxu0
  %v581 = vadd.f32 0.0, %v580
  %v582 = vpop.f32.mrf.mxu0
  %v583 = vpop.f32.mrf.mxu0
  %584 = vdwg.mxu0
  %v589 = vcombine.low %v538, %v540
  %v590 = vcombine.low %v579, %v581
  %v592 = vunpack.c.l.s4 1983009808
  %v593 = vunpack.c.0.s8 %v592
  %v594 = vlaneseq
  %v595 = vshrl.u32 %v594, 7
  %v596 = vsub.s32 %v593, %v595
  %v597 = vrot.slane %v589, %v596
  %v599 = vunpack.c.l.s4 1983009808
  %v600 = vunpack.c.0.s8 %v599
  %v601 = vlaneseq
  %v602 = vshrl.u32 %v601, 7
  %v603 = vsub.s32 %v600, %v602
  %v604 = vrot.slane %v590, %v603
  %v605 = vcombine.low %v597, %v604
  %v607 = vadd.f32 %v501, %v605
  %v608 = vxor.u32 %v607, 2147483648
  %v609 = vmul.f32 %v608, 1.442695
  %v610 = vpow.pop %v609
  %v611 = vadd.f32 %v610, 1.0
  %v612 = vrcp.pop %v611
  %v613 = vmul.f32 1.0, %v612
  %v615 = vrot.slane %v607, 2
  %v617 = vxor.u32 %v615, 2147483648
  %v618 = vmul.f32 %v617, 1.442695
  %v619 = vpow.pop %v618
  %v620 = vadd.f32 %v619, 1.0
  %v621 = vrcp.pop %v620
  %v622 = vmul.f32 1.0, %v621
  %v623 = vrot.slane %v607, 4
  %v625 = vtanh.pop %v623
  %v626 = vrot.slane %v607, 6
  %v628 = vxor.u32 %v626, 2147483648
  %v629 = vmul.f32 %v628, 1.442695
  %v630 = vpow.pop %v629
  %v631 = vadd.f32 %v630, 1.0
  %v632 = vrcp.pop %v631
  %v633 = vmul.f32 1.0, %v632
  %v634 = vmul.f32 %v622, %v499
  %v635 = vmul.f32 %v613, %v625
  %v636 = vadd.f32 %v634, %v635
  %v637 = vtanh.pop %v636
  %v638 = vmul.f32 %v633, %v637
  %639 = vst [vmem:[#allocation3] sm:$0x3] %v636
  %640 = vst [vmem:[#allocation2] sm:$0x3] %v638
  %s641 = scalar_lea.vmem %s2, 4
  %642 = vst [vmem:[%s641] sm:$0x3] %v638
  %v643 = vld [vmem:[#allocation2] sm:$0x3]
  %v644 = vld [vmem:[#allocation3] sm:$0x3]
  %s645 = scalar_lea.vmem %s0, 24
  %v646 = vld [vmem:[%s645] sm:$0xff]
  %v647 = vpack.c.bf16 %v643, %v643
  %648 = vmatprep.subr.bf16.mxu0 %v179
  %649 = vmatpush1.bf16.msra.mxu0 %v178
  %650 = vmatprep.subr.bf16.mxu0 %v175
  %651 = vmatpush1.bf16.msra.mxu0 %v174
  %652 = vmatprep.subr.bf16.mxu0 %v171
  %653 = vmatpush1.bf16.msra.mxu0 %v170
  %654 = vmatprep.subr.bf16.mxu0 %v167
  %655 = vmatpush1.bf16.msra.mxu0 %v166
  %656 = vmatprep.subr.bf16.mxu0 %v163
  %657 = vmatpush1.bf16.msra.mxu0 %v162
  %658 = vmatprep.subr.bf16.mxu0 %v159
  %659 = vmatpush1.bf16.msra.mxu0 %v158
  %660 = vmatprep.subr.bf16.mxu0 %v155
  %661 = vmatpush1.bf16.msra.mxu0 %v154
  %662 = vmatprep.subr.bf16.mxu0 %v151
  %663 = vmatpush1.bf16.msra.mxu0 %v150
  %664 = vmatprep.subr.bf16.mxu0 0
  %665 = vmatpush2.bf16.msra.mxu0 0
  %666 = vmatprep.subr.bf16.mxu0 0
  %667 = vmatpush2.bf16.msra.mxu0 0
  %668 = vmatprep.subr.bf16.mxu0 0
  %669 = vmatpush2.bf16.msra.mxu0 0
  %670 = vmatprep.subr.bf16.mxu0 0
  %671 = vmatpush2.bf16.msra.mxu0 0
  %672 = vmatprep.subr.bf16.mxu0 0
  %673 = vmatpush2.bf16.msra.mxu0 0
  %674 = vmatprep.subr.bf16.mxu0 0
  %675 = vmatpush2.bf16.msra.mxu0 0
  %676 = vmatprep.subr.bf16.mxu0 0
  %677 = vmatpush2.bf16.msra.mxu0 0
  %678 = vmatprep.subr.bf16.mxu0 0
  %679 = vmatpush2.bf16.msra.mxu0 0
  %680 = vmatprep.mubr.bf16.mxu0 0
  %681 = vmatmul.mubr.bf16.gmra.mxu0 %v647
  %v682 = vpop.f32.mrf.mxu0
  %v683 = vadd.f32 0.0, %v682
  %v684 = vpop.f32.mrf.mxu0
  %v685 = vadd.f32 0.0, %v684
  %v686 = vpop.f32.mrf.mxu0
  %v687 = vpop.f32.mrf.mxu0
  %688 = vdwg.mxu0
  %689 = vmatprep.subr.bf16.mxu0 %v181
  %690 = vmatpush1.bf16.msra.mxu0 %v180
  %691 = vmatprep.subr.bf16.mxu0 %v177
  %692 = vmatpush1.bf16.msra.mxu0 %v176
  %693 = vmatprep.subr.bf16.mxu0 %v173
  %694 = vmatpush1.bf16.msra.mxu0 %v172
  %695 = vmatprep.subr.bf16.mxu0 %v169
  %696 = vmatpush1.bf16.msra.mxu0 %v168
  %697 = vmatprep.subr.bf16.mxu0 %v165
  %698 = vmatpush1.bf16.msra.mxu0 %v164
  %699 = vmatprep.subr.bf16.mxu0 %v161
  %700 = vmatpush1.bf16.msra.mxu0 %v160
  %701 = vmatprep.subr.bf16.mxu0 %v157
  %702 = vmatpush1.bf16.msra.mxu0 %v156
  %703 = vmatprep.subr.bf16.mxu0 %v153
  %704 = vmatpush1.bf16.msra.mxu0 %v152
  %705 = vmatprep.subr.bf16.mxu0 0
  %706 = vmatpush2.bf16.msra.mxu0 0
  %707 = vmatprep.subr.bf16.mxu0 0
  %708 = vmatpush2.bf16.msra.mxu0 0
  %709 = vmatprep.subr.bf16.mxu0 0
  %710 = vmatpush2.bf16.msra.mxu0 0
  %711 = vmatprep.subr.bf16.mxu0 0
  %712 = vmatpush2.bf16.msra.mxu0 0
  %713 = vmatprep.subr.bf16.mxu0 0
  %714 = vmatpush2.bf16.msra.mxu0 0
  %715 = vmatprep.subr.bf16.mxu0 0
  %716 = vmatpush2.bf16.msra.mxu0 0
  %717 = vmatprep.subr.bf16.mxu0 0
  %718 = vmatpush2.bf16.msra.mxu0 0
  %719 = vmatprep.subr.bf16.mxu0 0
  %720 = vmatpush2.bf16.msra.mxu0 0
  %721 = vmatprep.mubr.bf16.mxu0 0
  %722 = vmatmul.mubr.bf16.gmra.mxu0 %v647
  %v723 = vpop.f32.mrf.mxu0
  %v724 = vadd.f32 0.0, %v723
  %v725 = vpop.f32.mrf.mxu0
  %v726 = vadd.f32 0.0, %v725
  %v727 = vpop.f32.mrf.mxu0
  %v728 = vpop.f32.mrf.mxu0
  %729 = vdwg.mxu0
  %v734 = vcombine.low %v683, %v685
  %v735 = vcombine.low %v724, %v726
  %v737 = vunpack.c.l.s4 1983009808
  %v738 = vunpack.c.0.s8 %v737
  %v739 = vlaneseq
  %v740 = vshrl.u32 %v739, 7
  %v741 = vsub.s32 %v738, %v740
  %v742 = vrot.slane %v734, %v741
  %v744 = vunpack.c.l.s4 1983009808
  %v745 = vunpack.c.0.s8 %v744
  %v746 = vlaneseq
  %v747 = vshrl.u32 %v746, 7
  %v748 = vsub.s32 %v745, %v747
  %v749 = vrot.slane %v735, %v748
  %v750 = vcombine.low %v742, %v749
  %v752 = vadd.f32 %v646, %v750
  %v753 = vxor.u32 %v752, 2147483648
  %v754 = vmul.f32 %v753, 1.442695
  %v755 = vpow.pop %v754
  %v756 = vadd.f32 %v755, 1.0
  %v757 = vrcp.pop %v756
  %v758 = vmul.f32 1.0, %v757
  %v760 = vrot.slane %v752, 2
  %v762 = vxor.u32 %v760, 2147483648
  %v763 = vmul.f32 %v762, 1.442695
  %v764 = vpow.pop %v763
  %v765 = vadd.f32 %v764, 1.0
  %v766 = vrcp.pop %v765
  %v767 = vmul.f32 1.0, %v766
  %v768 = vrot.slane %v752, 4
  %v770 = vtanh.pop %v768
  %v771 = vrot.slane %v752, 6
  %v773 = vxor.u32 %v771, 2147483648
  %v774 = vmul.f32 %v773, 1.442695
  %v775 = vpow.pop %v774
  %v776 = vadd.f32 %v775, 1.0
  %v777 = vrcp.pop %v776
  %v778 = vmul.f32 1.0, %v777
  %v779 = vmul.f32 %v767, %v644
  %v780 = vmul.f32 %v758, %v770
  %v781 = vadd.f32 %v779, %v780
  %v782 = vtanh.pop %v781
  %v783 = vmul.f32 %v778, %v782
  %784 = vst [vmem:[#allocation3] sm:$0x3] %v781
  %785 = vst [vmem:[#allocation2] sm:$0x3] %v783
  %s786 = scalar_lea.vmem %s2, 6
  %787 = vst [vmem:[%s786] sm:$0x3] %v783
  %v788 = vld [vmem:[#allocation2] sm:$0x3]
  %v789 = vld [vmem:[#allocation3] sm:$0x3]
  %s790 = scalar_lea.vmem %s0, 32
  %v791 = vld [vmem:[%s790] sm:$0xff]
  %v792 = vpack.c.bf16 %v788, %v788
  %793 = vmatprep.subr.bf16.mxu0 %v179
  %794 = vmatpush1.bf16.msra.mxu0 %v178
  %795 = vmatprep.subr.bf16.mxu0 %v175
  %796 = vmatpush1.bf16.msra.mxu0 %v174
  %797 = vmatprep.subr.bf16.mxu0 %v171
  %798 = vmatpush1.bf16.msra.mxu0 %v170
  %799 = vmatprep.subr.bf16.mxu0 %v167
  %800 = vmatpush1.bf16.msra.mxu0 %v166
  %801 = vmatprep.subr.bf16.mxu0 %v163
  %802 = vmatpush1.bf16.msra.mxu0 %v162
  %803 = vmatprep.subr.bf16.mxu0 %v159
  %804 = vmatpush1.bf16.msra.mxu0 %v158
  %805 = vmatprep.subr.bf16.mxu0 %v155
  %806 = vmatpush1.bf16.msra.mxu0 %v154
  %807 = vmatprep.subr.bf16.mxu0 %v151
  %808 = vmatpush1.bf16.msra.mxu0 %v150
  %809 = vmatprep.subr.bf16.mxu0 0
  %810 = vmatpush2.bf16.msra.mxu0 0
  %811 = vmatprep.subr.bf16.mxu0 0
  %812 = vmatpush2.bf16.msra.mxu0 0
  %813 = vmatprep.subr.bf16.mxu0 0
  %814 = vmatpush2.bf16.msra.mxu0 0
  %815 = vmatprep.subr.bf16.mxu0 0
  %816 = vmatpush2.bf16.msra.mxu0 0
  %817 = vmatprep.subr.bf16.mxu0 0
  %818 = vmatpush2.bf16.msra.mxu0 0
  %819 = vmatprep.subr.bf16.mxu0 0
  %820 = vmatpush2.bf16.msra.mxu0 0
  %821 = vmatprep.subr.bf16.mxu0 0
  %822 = vmatpush2.bf16.msra.mxu0 0
  %823 = vmatprep.subr.bf16.mxu0 0
  %824 = vmatpush2.bf16.msra.mxu0 0
  %825 = vmatprep.mubr.bf16.mxu0 0
  %826 = vmatmul.mubr.bf16.gmra.mxu0 %v792
  %v827 = vpop.f32.mrf.mxu0
  %v828 = vadd.f32 0.0, %v827
  %v829 = vpop.f32.mrf.mxu0
  %v830 = vadd.f32 0.0, %v829
  %v831 = vpop.f32.mrf.mxu0
  %v832 = vpop.f32.mrf.mxu0
  %833 = vdwg.mxu0
  %834 = vmatprep.subr.bf16.mxu0 %v181
  %835 = vmatpush1.bf16.msra.mxu0 %v180
  %836 = vmatprep.subr.bf16.mxu0 %v177
  %837 = vmatpush1.bf16.msra.mxu0 %v176
  %838 = vmatprep.subr.bf16.mxu0 %v173
  %839 = vmatpush1.bf16.msra.mxu0 %v172
  %840 = vmatprep.subr.bf16.mxu0 %v169
  %841 = vmatpush1.bf16.msra.mxu0 %v168
  %842 = vmatprep.subr.bf16.mxu0 %v165
  %843 = vmatpush1.bf16.msra.mxu0 %v164
  %844 = vmatprep.subr.bf16.mxu0 %v161
  %845 = vmatpush1.bf16.msra.mxu0 %v160
  %846 = vmatprep.subr.bf16.mxu0 %v157
  %847 = vmatpush1.bf16.msra.mxu0 %v156
  %848 = vmatprep.subr.bf16.mxu0 %v153
  %849 = vmatpush1.bf16.msra.mxu0 %v152
  %850 = vmatprep.subr.bf16.mxu0 0
  %851 = vmatpush2.bf16.msra.mxu0 0
  %852 = vmatprep.subr.bf16.mxu0 0
  %853 = vmatpush2.bf16.msra.mxu0 0
  %854 = vmatprep.subr.bf16.mxu0 0
  %855 = vmatpush2.bf16.msra.mxu0 0
  %856 = vmatprep.subr.bf16.mxu0 0
  %857 = vmatpush2.bf16.msra.mxu0 0
  %858 = vmatprep.subr.bf16.mxu0 0
  %859 = vmatpush2.bf16.msra.mxu0 0
  %860 = vmatprep.subr.bf16.mxu0 0
  %861 = vmatpush2.bf16.msra.mxu0 0
  %862 = vmatprep.subr.bf16.mxu0 0
  %863 = vmatpush2.bf16.msra.mxu0 0
  %864 = vmatprep.subr.bf16.mxu0 0
  %865 = vmatpush2.bf16.msra.mxu0 0
  %866 = vmatprep.mubr.bf16.mxu0 0
  %867 = vmatmul.mubr.bf16.gmra.mxu0 %v792
  %v868 = vpop.f32.mrf.mxu0
  %v869 = vadd.f32 0.0, %v868
  %v870 = vpop.f32.mrf.mxu0
  %v871 = vadd.f32 0.0, %v870
  %v872 = vpop.f32.mrf.mxu0
  %v873 = vpop.f32.mrf.mxu0
  %874 = vdwg.mxu0
  %v879 = vcombine.low %v828, %v830
  %v880 = vcombine.low %v869, %v871
  %v882 = vunpack.c.l.s4 1983009808
  %v883 = vunpack.c.0.s8 %v882
  %v884 = vlaneseq
  %v885 = vshrl.u32 %v884, 7
  %v886 = vsub.s32 %v883, %v885
  %v887 = vrot.slane %v879, %v886
  %v889 = vunpack.c.l.s4 1983009808
  %v890 = vunpack.c.0.s8 %v889
  %v891 = vlaneseq
  %v892 = vshrl.u32 %v891, 7
  %v893 = vsub.s32 %v890, %v892
  %v894 = vrot.slane %v880, %v893
  %v895 = vcombine.low %v887, %v894
  %v897 = vadd.f32 %v791, %v895
  %v898 = vxor.u32 %v897, 2147483648
  %v899 = vmul.f32 %v898, 1.442695
  %v900 = vpow.pop %v899
  %v901 = vadd.f32 %v900, 1.0
  %v902 = vrcp.pop %v901
  %v903 = vmul.f32 1.0, %v902
  %v905 = vrot.slane %v897, 2
  %v907 = vxor.u32 %v905, 2147483648
  %v908 = vmul.f32 %v907, 1.442695
  %v909 = vpow.pop %v908
  %v910 = vadd.f32 %v909, 1.0
  %v911 = vrcp.pop %v910
  %v912 = vmul.f32 1.0, %v911
  %v913 = vrot.slane %v897, 4
  %v915 = vtanh.pop %v913
  %v916 = vrot.slane %v897, 6
  %v918 = vxor.u32 %v916, 2147483648
  %v919 = vmul.f32 %v918, 1.442695
  %v920 = vpow.pop %v919
  %v921 = vadd.f32 %v920, 1.0
  %v922 = vrcp.pop %v921
  %v923 = vmul.f32 1.0, %v922
  %v924 = vmul.f32 %v912, %v789
  %v925 = vmul.f32 %v903, %v915
  %v926 = vadd.f32 %v924, %v925
  %v927 = vtanh.pop %v926
  %v928 = vmul.f32 %v923, %v927
  %929 = vst [vmem:[#allocation3] sm:$0x3] %v926
  %930 = vst [vmem:[#allocation2] sm:$0x3] %v928
  %s931 = scalar_lea.vmem %s2, 8
  %932 = vst [vmem:[%s931] sm:$0x3] %v928
  %v933 = vld [vmem:[#allocation2] sm:$0x3]
  %v934 = vld [vmem:[#allocation3] sm:$0x3]
  %s935 = scalar_lea.vmem %s0, 40
  %v936 = vld [vmem:[%s935] sm:$0xff]
  %v937 = vpack.c.bf16 %v933, %v933
  %938 = vmatprep.subr.bf16.mxu0 %v179
  %939 = vmatpush1.bf16.msra.mxu0 %v178
  %940 = vmatprep.subr.bf16.mxu0 %v175
  %941 = vmatpush1.bf16.msra.mxu0 %v174
  %942 = vmatprep.subr.bf16.mxu0 %v171
  %943 = vmatpush1.bf16.msra.mxu0 %v170
  %944 = vmatprep.subr.bf16.mxu0 %v167
  %945 = vmatpush1.bf16.msra.mxu0 %v166
  %946 = vmatprep.subr.bf16.mxu0 %v163
  %947 = vmatpush1.bf16.msra.mxu0 %v162
  %948 = vmatprep.subr.bf16.mxu0 %v159
  %949 = vmatpush1.bf16.msra.mxu0 %v158
  %950 = vmatprep.subr.bf16.mxu0 %v155
  %951 = vmatpush1.bf16.msra.mxu0 %v154
  %952 = vmatprep.subr.bf16.mxu0 %v151
  %953 = vmatpush1.bf16.msra.mxu0 %v150
  %954 = vmatprep.subr.bf16.mxu0 0
  %955 = vmatpush2.bf16.msra.mxu0 0
  %956 = vmatprep.subr.bf16.mxu0 0
  %957 = vmatpush2.bf16.msra.mxu0 0
  %958 = vmatprep.subr.bf16.mxu0 0
  %959 = vmatpush2.bf16.msra.mxu0 0
  %960 = vmatprep.subr.bf16.mxu0 0
  %961 = vmatpush2.bf16.msra.mxu0 0
  %962 = vmatprep.subr.bf16.mxu0 0
  %963 = vmatpush2.bf16.msra.mxu0 0
  %964 = vmatprep.subr.bf16.mxu0 0
  %965 = vmatpush2.bf16.msra.mxu0 0
  %966 = vmatprep.subr.bf16.mxu0 0
  %967 = vmatpush2.bf16.msra.mxu0 0
  %968 = vmatprep.subr.bf16.mxu0 0
  %969 = vmatpush2.bf16.msra.mxu0 0
  %970 = vmatprep.mubr.bf16.mxu0 0
  %971 = vmatmul.mubr.bf16.gmra.mxu0 %v937
  %v972 = vpop.f32.mrf.mxu0
  %v973 = vadd.f32 0.0, %v972
  %v974 = vpop.f32.mrf.mxu0
  %v975 = vadd.f32 0.0, %v974
  %v976 = vpop.f32.mrf.mxu0
  %v977 = vpop.f32.mrf.mxu0
  %978 = vdwg.mxu0
  %979 = vmatprep.subr.bf16.mxu0 %v181
  %980 = vmatpush1.bf16.msra.mxu0 %v180
  %981 = vmatprep.subr.bf16.mxu0 %v177
  %982 = vmatpush1.bf16.msra.mxu0 %v176
  %983 = vmatprep.subr.bf16.mxu0 %v173
  %984 = vmatpush1.bf16.msra.mxu0 %v172
  %985 = vmatprep.subr.bf16.mxu0 %v169
  %986 = vmatpush1.bf16.msra.mxu0 %v168
  %987 = vmatprep.subr.bf16.mxu0 %v165
  %988 = vmatpush1.bf16.msra.mxu0 %v164
  %989 = vmatprep.subr.bf16.mxu0 %v161
  %990 = vmatpush1.bf16.msra.mxu0 %v160
  %991 = vmatprep.subr.bf16.mxu0 %v157
  %992 = vmatpush1.bf16.msra.mxu0 %v156
  %993 = vmatprep.subr.bf16.mxu0 %v153
  %994 = vmatpush1.bf16.msra.mxu0 %v152
  %995 = vmatprep.subr.bf16.mxu0 0
  %996 = vmatpush2.bf16.msra.mxu0 0
  %997 = vmatprep.subr.bf16.mxu0 0
  %998 = vmatpush2.bf16.msra.mxu0 0
  %999 = vmatprep.subr.bf16.mxu0 0
  %1000 = vmatpush2.bf16.msra.mxu0 0
  %1001 = vmatprep.subr.bf16.mxu0 0
  %1002 = vmatpush2.bf16.msra.mxu0 0
  %1003 = vmatprep.subr.bf16.mxu0 0
  %1004 = vmatpush2.bf16.msra.mxu0 0
  %1005 = vmatprep.subr.bf16.mxu0 0
  %1006 = vmatpush2.bf16.msra.mxu0 0
  %1007 = vmatprep.subr.bf16.mxu0 0
  %1008 = vmatpush2.bf16.msra.mxu0 0
  %1009 = vmatprep.subr.bf16.mxu0 0
  %1010 = vmatpush2.bf16.msra.mxu0 0
  %1011 = vmatprep.mubr.bf16.mxu0 0
  %1012 = vmatmul.mubr.bf16.gmra.mxu0 %v937
  %v1013 = vpop.f32.mrf.mxu0
  %v1014 = vadd.f32 0.0, %v1013
  %v1015 = vpop.f32.mrf.mxu0
  %v1016 = vadd.f32 0.0, %v1015
  %v1017 = vpop.f32.mrf.mxu0
  %v1018 = vpop.f32.mrf.mxu0
  %1019 = vdwg.mxu0
  %v1024 = vcombine.low %v973, %v975
  %v1025 = vcombine.low %v1014, %v1016
  %v1027 = vunpack.c.l.s4 1983009808
  %v1028 = vunpack.c.0.s8 %v1027
  %v1029 = vlaneseq
  %v1030 = vshrl.u32 %v1029, 7
  %v1031 = vsub.s32 %v1028, %v1030
  %v1032 = vrot.slane %v1024, %v1031
  %v1034 = vunpack.c.l.s4 1983009808
  %v1035 = vunpack.c.0.s8 %v1034
  %v1036 = vlaneseq
  %v1037 = vshrl.u32 %v1036, 7
  %v1038 = vsub.s32 %v1035, %v1037
  %v1039 = vrot.slane %v1025, %v1038
  %v1040 = vcombine.low %v1032, %v1039
  %v1042 = vadd.f32 %v936, %v1040
  %v1043 = vxor.u32 %v1042, 2147483648
  %v1044 = vmul.f32 %v1043, 1.442695
  %v1045 = vpow.pop %v1044
  %v1046 = vadd.f32 %v1045, 1.0
  %v1047 = vrcp.pop %v1046
  %v1048 = vmul.f32 1.0, %v1047
  %v1050 = vrot.slane %v1042, 2
  %v1052 = vxor.u32 %v1050, 2147483648
  %v1053 = vmul.f32 %v1052, 1.442695
  %v1054 = vpow.pop %v1053
  %v1055 = vadd.f32 %v1054, 1.0
  %v1056 = vrcp.pop %v1055
  %v1057 = vmul.f32 1.0, %v1056
  %v1058 = vrot.slane %v1042, 4
  %v1060 = vtanh.pop %v1058
  %v1061 = vrot.slane %v1042, 6
  %v1063 = vxor.u32 %v1061, 2147483648
  %v1064 = vmul.f32 %v1063, 1.442695
  %v1065 = vpow.pop %v1064
  %v1066 = vadd.f32 %v1065, 1.0
  %v1067 = vrcp.pop %v1066
  %v1068 = vmul.f32 1.0, %v1067
  %v1069 = vmul.f32 %v1057, %v934
  %v1070 = vmul.f32 %v1048, %v1060
  %v1071 = vadd.f32 %v1069, %v1070
  %v1072 = vtanh.pop %v1071
  %v1073 = vmul.f32 %v1068, %v1072
  %1074 = vst [vmem:[#allocation3] sm:$0x3] %v1071
  %1075 = vst [vmem:[#allocation2] sm:$0x3] %v1073
  %s1076 = scalar_lea.vmem %s2, 10
  %1077 = vst [vmem:[%s1076] sm:$0x3] %v1073
  %v1078 = vld [vmem:[#allocation2] sm:$0x3]
  %v1079 = vld [vmem:[#allocation3] sm:$0x3]
  %s1080 = scalar_lea.vmem %s0, 48
  %v1081 = vld [vmem:[%s1080] sm:$0xff]
  %v1082 = vpack.c.bf16 %v1078, %v1078
  %1083 = vmatprep.subr.bf16.mxu0 %v179
  %1084 = vmatpush1.bf16.msra.mxu0 %v178
  %1085 = vmatprep.subr.bf16.mxu0 %v175
  %1086 = vmatpush1.bf16.msra.mxu0 %v174
  %1087 = vmatprep.subr.bf16.mxu0 %v171
  %1088 = vmatpush1.bf16.msra.mxu0 %v170
  %1089 = vmatprep.subr.bf16.mxu0 %v167
  %1090 = vmatpush1.bf16.msra.mxu0 %v166
  %1091 = vmatprep.subr.bf16.mxu0 %v163
  %1092 = vmatpush1.bf16.msra.mxu0 %v162
  %1093 = vmatprep.subr.bf16.mxu0 %v159
  %1094 = vmatpush1.bf16.msra.mxu0 %v158
  %1095 = vmatprep.subr.bf16.mxu0 %v155
  %1096 = vmatpush1.bf16.msra.mxu0 %v154
  %1097 = vmatprep.subr.bf16.mxu0 %v151
  %1098 = vmatpush1.bf16.msra.mxu0 %v150
  %1099 = vmatprep.subr.bf16.mxu0 0
  %1100 = vmatpush2.bf16.msra.mxu0 0
  %1101 = vmatprep.subr.bf16.mxu0 0
  %1102 = vmatpush2.bf16.msra.mxu0 0
  %1103 = vmatprep.subr.bf16.mxu0 0
  %1104 = vmatpush2.bf16.msra.mxu0 0
  %1105 = vmatprep.subr.bf16.mxu0 0
  %1106 = vmatpush2.bf16.msra.mxu0 0
  %1107 = vmatprep.subr.bf16.mxu0 0
  %1108 = vmatpush2.bf16.msra.mxu0 0
  %1109 = vmatprep.subr.bf16.mxu0 0
  %1110 = vmatpush2.bf16.msra.mxu0 0
  %1111 = vmatprep.subr.bf16.mxu0 0
  %1112 = vmatpush2.bf16.msra.mxu0 0
  %1113 = vmatprep.subr.bf16.mxu0 0
  %1114 = vmatpush2.bf16.msra.mxu0 0
  %1115 = vmatprep.mubr.bf16.mxu0 0
  %1116 = vmatmul.mubr.bf16.gmra.mxu0 %v1082
  %v1117 = vpop.f32.mrf.mxu0
  %v1118 = vadd.f32 0.0, %v1117
  %v1119 = vpop.f32.mrf.mxu0
  %v1120 = vadd.f32 0.0, %v1119
  %v1121 = vpop.f32.mrf.mxu0
  %v1122 = vpop.f32.mrf.mxu0
  %1123 = vdwg.mxu0
  %1124 = vmatprep.subr.bf16.mxu0 %v181
  %1125 = vmatpush1.bf16.msra.mxu0 %v180
  %1126 = vmatprep.subr.bf16.mxu0 %v177
  %1127 = vmatpush1.bf16.msra.mxu0 %v176
  %1128 = vmatprep.subr.bf16.mxu0 %v173
  %1129 = vmatpush1.bf16.msra.mxu0 %v172
  %1130 = vmatprep.subr.bf16.mxu0 %v169
  %1131 = vmatpush1.bf16.msra.mxu0 %v168
  %1132 = vmatprep.subr.bf16.mxu0 %v165
  %1133 = vmatpush1.bf16.msra.mxu0 %v164
  %1134 = vmatprep.subr.bf16.mxu0 %v161
  %1135 = vmatpush1.bf16.msra.mxu0 %v160
  %1136 = vmatprep.subr.bf16.mxu0 %v157
  %1137 = vmatpush1.bf16.msra.mxu0 %v156
  %1138 = vmatprep.subr.bf16.mxu0 %v153
  %1139 = vmatpush1.bf16.msra.mxu0 %v152
  %1140 = vmatprep.subr.bf16.mxu0 0
  %1141 = vmatpush2.bf16.msra.mxu0 0
  %1142 = vmatprep.subr.bf16.mxu0 0
  %1143 = vmatpush2.bf16.msra.mxu0 0
  %1144 = vmatprep.subr.bf16.mxu0 0
  %1145 = vmatpush2.bf16.msra.mxu0 0
  %1146 = vmatprep.subr.bf16.mxu0 0
  %1147 = vmatpush2.bf16.msra.mxu0 0
  %1148 = vmatprep.subr.bf16.mxu0 0
  %1149 = vmatpush2.bf16.msra.mxu0 0
  %1150 = vmatprep.subr.bf16.mxu0 0
  %1151 = vmatpush2.bf16.msra.mxu0 0
  %1152 = vmatprep.subr.bf16.mxu0 0
  %1153 = vmatpush2.bf16.msra.mxu0 0
  %1154 = vmatprep.subr.bf16.mxu0 0
  %1155 = vmatpush2.bf16.msra.mxu0 0
  %1156 = vmatprep.mubr.bf16.mxu0 0
  %1157 = vmatmul.mubr.bf16.gmra.mxu0 %v1082
  %v1158 = vpop.f32.mrf.mxu0
  %v1159 = vadd.f32 0.0, %v1158
  %v1160 = vpop.f32.mrf.mxu0
  %v1161 = vadd.f32 0.0, %v1160
  %v1162 = vpop.f32.mrf.mxu0
  %v1163 = vpop.f32.mrf.mxu0
  %1164 = vdwg.mxu0
  %v1169 = vcombine.low %v1118, %v1120
  %v1170 = vcombine.low %v1159, %v1161
  %v1172 = vunpack.c.l.s4 1983009808
  %v1173 = vunpack.c.0.s8 %v1172
  %v1174 = vlaneseq
  %v1175 = vshrl.u32 %v1174, 7
  %v1176 = vsub.s32 %v1173, %v1175
  %v1177 = vrot.slane %v1169, %v1176
  %v1179 = vunpack.c.l.s4 1983009808
  %v1180 = vunpack.c.0.s8 %v1179
  %v1181 = vlaneseq
  %v1182 = vshrl.u32 %v1181, 7
  %v1183 = vsub.s32 %v1180, %v1182
  %v1184 = vrot.slane %v1170, %v1183
  %v1185 = vcombine.low %v1177, %v1184
  %v1187 = vadd.f32 %v1081, %v1185
  %v1188 = vxor.u32 %v1187, 2147483648
  %v1189 = vmul.f32 %v1188, 1.442695
  %v1190 = vpow.pop %v1189
  %v1191 = vadd.f32 %v1190, 1.0
  %v1192 = vrcp.pop %v1191
  %v1193 = vmul.f32 1.0, %v1192
  %v1195 = vrot.slane %v1187, 2
  %v1197 = vxor.u32 %v1195, 2147483648
  %v1198 = vmul.f32 %v1197, 1.442695
  %v1199 = vpow.pop %v1198
  %v1200 = vadd.f32 %v1199, 1.0
  %v1201 = vrcp.pop %v1200
  %v1202 = vmul.f32 1.0, %v1201
  %v1203 = vrot.slane %v1187, 4
  %v1205 = vtanh.pop %v1203
  %v1206 = vrot.slane %v1187, 6
  %v1208 = vxor.u32 %v1206, 2147483648
  %v1209 = vmul.f32 %v1208, 1.442695
  %v1210 = vpow.pop %v1209
  %v1211 = vadd.f32 %v1210, 1.0
  %v1212 = vrcp.pop %v1211
  %v1213 = vmul.f32 1.0, %v1212
  %v1214 = vmul.f32 %v1202, %v1079
  %v1215 = vmul.f32 %v1193, %v1205
  %v1216 = vadd.f32 %v1214, %v1215
  %v1217 = vtanh.pop %v1216
  %v1218 = vmul.f32 %v1213, %v1217
  %1219 = vst [vmem:[#allocation3] sm:$0x3] %v1216
  %1220 = vst [vmem:[#allocation2] sm:$0x3] %v1218
  %s1221 = scalar_lea.vmem %s2, 12
  %1222 = vst [vmem:[%s1221] sm:$0x3] %v1218
  %v1223 = vld [vmem:[#allocation2] sm:$0x3]
  %v1224 = vld [vmem:[#allocation3] sm:$0x3]
  %s1225 = scalar_lea.vmem %s0, 56
  %v1226 = vld [vmem:[%s1225] sm:$0xff]
  %v1227 = vpack.c.bf16 %v1223, %v1223
  %1228 = vmatprep.subr.bf16.mxu0 %v179
  %1229 = vmatpush1.bf16.msra.mxu0 %v178
  %1230 = vmatprep.subr.bf16.mxu0 %v175
  %1231 = vmatpush1.bf16.msra.mxu0 %v174
  %1232 = vmatprep.subr.bf16.mxu0 %v171
  %1233 = vmatpush1.bf16.msra.mxu0 %v170
  %1234 = vmatprep.subr.bf16.mxu0 %v167
  %1235 = vmatpush1.bf16.msra.mxu0 %v166
  %1236 = vmatprep.subr.bf16.mxu0 %v163
  %1237 = vmatpush1.bf16.msra.mxu0 %v162
  %1238 = vmatprep.subr.bf16.mxu0 %v159
  %1239 = vmatpush1.bf16.msra.mxu0 %v158
  %1240 = vmatprep.subr.bf16.mxu0 %v155
  %1241 = vmatpush1.bf16.msra.mxu0 %v154
  %1242 = vmatprep.subr.bf16.mxu0 %v151
  %1243 = vmatpush1.bf16.msra.mxu0 %v150
  %1244 = vmatprep.subr.bf16.mxu0 0
  %1245 = vmatpush2.bf16.msra.mxu0 0
  %1246 = vmatprep.subr.bf16.mxu0 0
  %1247 = vmatpush2.bf16.msra.mxu0 0
  %1248 = vmatprep.subr.bf16.mxu0 0
  %1249 = vmatpush2.bf16.msra.mxu0 0
  %1250 = vmatprep.subr.bf16.mxu0 0
  %1251 = vmatpush2.bf16.msra.mxu0 0
  %1252 = vmatprep.subr.bf16.mxu0 0
  %1253 = vmatpush2.bf16.msra.mxu0 0
  %1254 = vmatprep.subr.bf16.mxu0 0
  %1255 = vmatpush2.bf16.msra.mxu0 0
  %1256 = vmatprep.subr.bf16.mxu0 0
  %1257 = vmatpush2.bf16.msra.mxu0 0
  %1258 = vmatprep.subr.bf16.mxu0 0
  %1259 = vmatpush2.bf16.msra.mxu0 0
  %1260 = vmatprep.mubr.bf16.mxu0 0
  %1261 = vmatmul.mubr.bf16.gmra.mxu0 %v1227
  %v1262 = vpop.f32.mrf.mxu0
  %v1263 = vadd.f32 0.0, %v1262
  %v1264 = vpop.f32.mrf.mxu0
  %v1265 = vadd.f32 0.0, %v1264
  %v1266 = vpop.f32.mrf.mxu0
  %v1267 = vpop.f32.mrf.mxu0
  %1268 = vdwg.mxu0
  %1269 = vmatprep.subr.bf16.mxu0 %v181
  %1270 = vmatpush1.bf16.msra.mxu0 %v180
  %1271 = vmatprep.subr.bf16.mxu0 %v177
  %1272 = vmatpush1.bf16.msra.mxu0 %v176
  %1273 = vmatprep.subr.bf16.mxu0 %v173
  %1274 = vmatpush1.bf16.msra.mxu0 %v172
  %1275 = vmatprep.subr.bf16.mxu0 %v169
  %1276 = vmatpush1.bf16.msra.mxu0 %v168
  %1277 = vmatprep.subr.bf16.mxu0 %v165
  %1278 = vmatpush1.bf16.msra.mxu0 %v164
  %1279 = vmatprep.subr.bf16.mxu0 %v161
  %1280 = vmatpush1.bf16.msra.mxu0 %v160
  %1281 = vmatprep.subr.bf16.mxu0 %v157
  %1282 = vmatpush1.bf16.msra.mxu0 %v156
  %1283 = vmatprep.subr.bf16.mxu0 %v153
  %1284 = vmatpush1.bf16.msra.mxu0 %v152
  %1285 = vmatprep.subr.bf16.mxu0 0
  %1286 = vmatpush2.bf16.msra.mxu0 0
  %1287 = vmatprep.subr.bf16.mxu0 0
  %1288 = vmatpush2.bf16.msra.mxu0 0
  %1289 = vmatprep.subr.bf16.mxu0 0
  %1290 = vmatpush2.bf16.msra.mxu0 0
  %1291 = vmatprep.subr.bf16.mxu0 0
  %1292 = vmatpush2.bf16.msra.mxu0 0
  %1293 = vmatprep.subr.bf16.mxu0 0
  %1294 = vmatpush2.bf16.msra.mxu0 0
  %1295 = vmatprep.subr.bf16.mxu0 0
  %1296 = vmatpush2.bf16.msra.mxu0 0
  %1297 = vmatprep.subr.bf16.mxu0 0
  %1298 = vmatpush2.bf16.msra.mxu0 0
  %1299 = vmatprep.subr.bf16.mxu0 0
  %1300 = vmatpush2.bf16.msra.mxu0 0
  %1301 = vmatprep.mubr.bf16.mxu0 0
  %1302 = vmatmul.mubr.bf16.gmra.mxu0 %v1227
  %v1303 = vpop.f32.mrf.mxu0
  %v1304 = vadd.f32 0.0, %v1303
  %v1305 = vpop.f32.mrf.mxu0
  %v1306 = vadd.f32 0.0, %v1305
  %v1307 = vpop.f32.mrf.mxu0
  %v1308 = vpop.f32.mrf.mxu0
  %1309 = vdwg.mxu0
  %v1314 = vcombine.low %v1263, %v1265
  %v1315 = vcombine.low %v1304, %v1306
  %v1317 = vunpack.c.l.s4 1983009808
  %v1318 = vunpack.c.0.s8 %v1317
  %v1319 = vlaneseq
  %v1320 = vshrl.u32 %v1319, 7
  %v1321 = vsub.s32 %v1318, %v1320
  %v1322 = vrot.slane %v1314, %v1321
  %v1324 = vunpack.c.l.s4 1983009808
  %v1325 = vunpack.c.0.s8 %v1324
  %v1326 = vlaneseq
  %v1327 = vshrl.u32 %v1326, 7
  %v1328 = vsub.s32 %v1325, %v1327
  %v1329 = vrot.slane %v1315, %v1328
  %v1330 = vcombine.low %v1322, %v1329
  %v1332 = vadd.f32 %v1226, %v1330
  %v1333 = vxor.u32 %v1332, 2147483648
  %v1334 = vmul.f32 %v1333, 1.442695
  %v1335 = vpow.pop %v1334
  %v1336 = vadd.f32 %v1335, 1.0
  %v1337 = vrcp.pop %v1336
  %v1338 = vmul.f32 1.0, %v1337
  %v1340 = vrot.slane %v1332, 2
  %v1342 = vxor.u32 %v1340, 2147483648
  %v1343 = vmul.f32 %v1342, 1.442695
  %v1344 = vpow.pop %v1343
  %v1345 = vadd.f32 %v1344, 1.0
  %v1346 = vrcp.pop %v1345
  %v1347 = vmul.f32 1.0, %v1346
  %v1348 = vrot.slane %v1332, 4
  %v1350 = vtanh.pop %v1348
  %v1351 = vrot.slane %v1332, 6
  %v1353 = vxor.u32 %v1351, 2147483648
  %v1354 = vmul.f32 %v1353, 1.442695
  %v1355 = vpow.pop %v1354
  %v1356 = vadd.f32 %v1355, 1.0
  %v1357 = vrcp.pop %v1356
  %v1358 = vmul.f32 1.0, %v1357
  %v1359 = vmul.f32 %v1347, %v1224
  %v1360 = vmul.f32 %v1338, %v1350
  %v1361 = vadd.f32 %v1359, %v1360
  %v1362 = vtanh.pop %v1361
  %v1363 = vmul.f32 %v1358, %v1362
  %1364 = vst [vmem:[#allocation3] sm:$0x3] %v1361
  %1365 = vst [vmem:[#allocation2] sm:$0x3] %v1363
  %s1366 = scalar_lea.vmem %s2, 14
  %1367 = vst [vmem:[%s1366] sm:$0x3] %v1363
  // Predicated region
  $region14: #{a_call__.2} parent=0 // pred_check
    _
  $region15: #{a_call__.2} parent=0 // pred_check_branch
    %1369 = sbr.rel (0) target = $region17
  $region16: #{a_call__.2} parent=0 // pred_region
    _
  $region17: #{a_call__.2} parent=0 // pred_fallthru
    _
  // Predicated region
  $region18: #{a_call__.2} parent=0 // pred_check
    _
  $region19: #{a_call__.2} parent=0 // pred_check_branch
    %1371 = sbr.rel (0) target = $region21
  $region20: #{a_call__.2} parent=0 // pred_region
    _
  $region21: #{a_call__.2} parent=0 // pred_fallthru
    _

</llo_original>
